<compile_context>
chip_gen: v7x
topology: tpu7x:2x2x1
jax: 0.10.0
libtpu: 0.0.40
codegen_flags: <defaults>
</compile_context>

<pallas_src>
import functools

import jax
import jax.numpy as jnp
from jax.experimental import pallas as pl
from jax.experimental.pallas import tpu as pltpu


def _lstm_shallow_kernel(x_ref,            # (T*Bp, F)  raw-reshaped, batch-padded input
                         wih1_ref,         # (F, 4H)
                         whh1_ref,         # (H, 4H)
                         b1_ref,           # (1, 4H)
                         wih2_ref,         # (H, 4H)
                         whh2_ref,         # (H, 4H)
                         b2_ref,           # (1, 4H)
                         wfc_ref,          # (H, O)
                         bfc_ref,          # (1, O)
                         out_ref,          # (Bp, O)
                         *, hidden_dim, batch_padded, series_length):
    H, Bp, T = hidden_dim, batch_padded, series_length

    # ---- layer-1 input projection for all timesteps in one MXU call -------
    xproj = (jnp.dot(x_ref[...], wih1_ref[...],
                     preferred_element_type=jnp.float32)
             + b1_ref[...])                               # (T*Bp, 4H)

    # ---- single-tanh gate activation constants (built ONCE, hoisted) -------
    # lanes [0,H)=i, [H,2H)=f, [2H,3H)=g, [3H,4H)=o  (PyTorch gate order)
    lane = jax.lax.broadcasted_iota(jnp.int32, (Bp, 4 * H), 1)
    is_g = jnp.logical_and(lane >= 2 * H, lane < 3 * H)
    # g lanes: tanh(x);   i/f/o lanes: sigmoid(x) = 0.5*tanh(0.5*x) + 0.5
    scale = jnp.where(is_g, 1.0, 0.5).astype(jnp.float32)   # pre & post scale
    shift = jnp.where(is_g, 0.0, 0.5).astype(jnp.float32)   # post bias
    b2b = jnp.broadcast_to(b2_ref[...], (Bp, 4 * H))         # hoisted broadcast

    def activate(gates):
        th = jnp.tanh(gates * scale)          # ONE EUP slab pass per cell
        act = th * scale + shift
        i = act[:, 0 * H:1 * H]
        f = act[:, 1 * H:2 * H]
        g = act[:, 2 * H:3 * H]
        o = act[:, 3 * H:4 * H]
        return i, f, g, o

    # h0, c0 = zeros (init_hidden); state lives in vregs across the unrolled loop
    h1 = jnp.zeros((Bp, H), jnp.float32)
    c1 = jnp.zeros((Bp, H), jnp.float32)
    h2 = jnp.zeros((Bp, H), jnp.float32)
    c2 = jnp.zeros((Bp, H), jnp.float32)

    # Fully unrolled at trace time (T is small & static) -> static indices,
    # full recurrence visible to the LLO scheduler, zero grid-step overhead.
    for t in range(T):
        # Recurrent matmuls only depend on previous-step state: issue them at
        # the top so they overlap the rest of the chain.  Weights are re-read
        # from VMEM each step (idle vld slots) to avoid long-lived vregs /
        # spills across the unrolled body.
        rec1 = jnp.dot(h1, whh1_ref[...], preferred_element_type=jnp.float32)
        rec2 = (jnp.dot(h2, whh2_ref[...], preferred_element_type=jnp.float32)
                + b2b)

        # ---- layer 1 (sublane-aligned static slice: Bp == 8) ----------------
        g1 = xproj[t * Bp:(t + 1) * Bp, :] + rec1
        i1, f1, gg1, o1 = activate(g1)
        c1 = f1 * c1 + i1 * gg1
        h1 = o1 * jnp.tanh(c1)

        # TODO(synk): nn.LSTM inter-layer dropout (p=0.1) only applies in
        # training mode; eval-mode forward is identity, which is what we model.

        # ---- layer 2: only h1_t @ W_ih2 sits on the serial dependence chain
        g2 = (jnp.dot(h1, wih2_ref[...], preferred_element_type=jnp.float32)
              + rec2)
        i2, f2, gg2, o2 = activate(g2)
        c2 = f2 * c2 + i2 * gg2
        h2 = o2 * jnp.tanh(c2)

    # x = x[-1]; x = self.fc(x)
    out_ref[...] = (jnp.dot(h2, wfc_ref[...],
                            preferred_element_type=jnp.float32)
                    + bfc_ref[...])


def lstm_shallow_forward(x, params, *, hidden_dim, output_dim):
    """x: (batch, series_length, num_features) float32."""
    B, T, F = x.shape
    H, O = hidden_dim, output_dim
    Bp = max(8, ((B + 7) // 8) * 8)      # pad batch to the 8-sublane tile

    # PyTorch: x.contiguous().view(series_length, batch, -1) is a raw row-major
    # reinterpretation.  Do it BEFORE padding so byte-level semantics match,
    # then pad the (independent) batch rows with zeros and flatten.
    x_tm = jnp.reshape(x.astype(jnp.float32), (T, B, F))
    if Bp != B:
        x_tm = jnp.pad(x_tm, ((0, 0), (0, Bp - B), (0, 0)))
    x2d = jnp.reshape(x_tm, (T * Bp, F))

    (wih1_t, whh1_t, b1, wih2_t, whh2_t, b2, wfc_t, bfc) = params

    kernel = functools.partial(_lstm_shallow_kernel,
                               hidden_dim=H, batch_padded=Bp,
                               series_length=T)

    # Whole arrays resident in VMEM; single grid step (footprint << 1 MiB on
    # every generation, so no tiling / vmem_limit tuning is needed).
    full = lambda shape: pl.BlockSpec(shape, lambda i: tuple(0 for _ in shape))

    out = pl.pallas_call(
        kernel,
        out_shape=jax.ShapeDtypeStruct((Bp, O), jnp.float32),
        grid_spec=pltpu.PrefetchScalarGridSpec(
            num_scalar_prefetch=0,
            grid=(1,),
            in_specs=[
                full((T * Bp, F)),       # x (raw-reshaped, time-major rows, padded B)
                full((F, 4 * H)),        # W_ih layer 0 (transposed)
                full((H, 4 * H)),        # W_hh layer 0 (transposed)
                full((1, 4 * H)),        # b_ih0 + b_hh0
                full((H, 4 * H)),        # W_ih layer 1 (transposed)
                full((H, 4 * H)),        # W_hh layer 1 (transposed)
                full((1, 4 * H)),        # b_ih1 + b_hh1
                full((H, O)),            # fc weight (transposed)
                full((1, O)),            # fc bias
            ],
            out_specs=pl.BlockSpec((Bp, O), lambda i: (0, 0)),
        ),
        compiler_params=pltpu.CompilerParams(
            dimension_semantics=("arbitrary",)),
    )(x2d, wih1_t, whh1_t, b1, wih2_t, whh2_t, b2, wfc_t, bfc)
    return out[:B]


# ----------------------- pure-JAX reference (for checking) -----------------
def lstm_shallow_reference(x, params, *, hidden_dim, output_dim):
    B, T, F = x.shape
    H = hidden_dim
    x_tm = jnp.reshape(x, (T, B, F)).astype(jnp.float32)
    (wih1_t, whh1_t, b1, wih2_t, whh2_t, b2, wfc_t, bfc) = params

    def cell(inp, h, c, wih_t, whh_t, b):
        gates = inp @ wih_t + h @ whh_t + b
        i = jax.nn.sigmoid(gates[:, 0 * H:1 * H])
        f = jax.nn.sigmoid(gates[:, 1 * H:2 * H])
        g = jnp.tanh(gates[:, 2 * H:3 * H])
        o = jax.nn.sigmoid(gates[:, 3 * H:4 * H])
        c_new = f * c + i * g
        h_new = o * jnp.tanh(c_new)
        return h_new, c_new

    def step(carry, x_t):
        h1, c1, h2, c2 = carry
        h1, c1 = cell(x_t, h1, c1, wih1_t, whh1_t, b1)
        h2, c2 = cell(h1, h2, c2, wih2_t, whh2_t, b2)
        return (h1, c1, h2, c2), None

    zeros = jnp.zeros((B, H), jnp.float32)
    (h1, c1, h2, c2), _ = jax.lax.scan(step, (zeros,) * 4, x_tm)
    return h2 @ wfc_t + bfc


# ----------------------- deterministic parameter init ----------------------
def init_params(key, num_features, hidden_dim, output_dim):
    F, H, O = num_features, hidden_dim, output_dim
    k = 1.0 / jnp.sqrt(jnp.float32(H))
    keys = jax.random.split(key, 10)
    u = lambda kk, shape: jax.random.uniform(kk, shape, jnp.float32, -k, k)

    # PyTorch nn.LSTM layouts: weight_ih_l0 (4H, F), weight_hh_l0 (4H, H), ...
    w_ih0 = u(keys[0], (4 * H, F))
    w_hh0 = u(keys[1], (4 * H, H))
    b_ih0 = u(keys[2], (4 * H,))
    b_hh0 = u(keys[3], (4 * H,))
    w_ih1 = u(keys[4], (4 * H, H))
    w_hh1 = u(keys[5], (4 * H, H))
    b_ih1 = u(keys[6], (4 * H,))
    b_hh1 = u(keys[7], (4 * H,))
    kf = 1.0 / jnp.sqrt(jnp.float32(H))
    w_fc = jax.random.uniform(keys[8], (O, H), jnp.float32, -kf, kf)
    b_fc = jax.random.uniform(keys[9], (O,), jnp.float32, -kf, kf)

    return (w_ih0.T, w_hh0.T, (b_ih0 + b_hh0)[None, :],
            w_ih1.T, w_hh1.T, (b_ih1 + b_hh1)[None, :],
            w_fc.T, b_fc[None, :])


if __name__ == "__main__":
    # Small shapes implied by the module's forward:
    batch_size = 4
    series_length = 8
    num_features = 16
    hidden_dim = 32
    output_dim = 8

    key = jax.random.PRNGKey(0)
    kx, kp = jax.random.split(key)
    x = jax.random.normal(kx, (batch_size, series_length, num_features),
                          jnp.float32)
    params = init_params(kp, num_features, hidden_dim, output_dim)

    out = lstm_shallow_forward(x, params, hidden_dim=hidden_dim,
                               output_dim=output_dim)
    out = jax.block_until_ready(out)

    ref = lstm_shallow_reference(x, params, hidden_dim=hidden_dim,
                                 output_dim=output_dim)
    assert out.shape == (batch_size, output_dim)
    assert jnp.allclose(out, ref, atol=1e-5, rtol=1e-5), "mismatch vs reference"

    print("KERNEL_OK")
</pallas_src>

<mosaic_0001>
module attributes {stable_mosaic.version = 11 : i64} {
  func.func @_lstm_shallow_kernel(%arg0: i32, %arg1: memref<64x16xf32, #tpu.memory_space<vmem>>, %arg2: memref<16x128xf32, #tpu.memory_space<vmem>>, %arg3: memref<32x128xf32, #tpu.memory_space<vmem>>, %arg4: memref<1x128xf32, #tpu.memory_space<vmem>>, %arg5: memref<32x128xf32, #tpu.memory_space<vmem>>, %arg6: memref<32x128xf32, #tpu.memory_space<vmem>>, %arg7: memref<1x128xf32, #tpu.memory_space<vmem>>, %arg8: memref<32x8xf32, #tpu.memory_space<vmem>>, %arg9: memref<1x8xf32, #tpu.memory_space<vmem>>, %arg10: memref<8x8xf32, #tpu.memory_space<vmem>>) attributes {dimension_semantics = [#tpu.dimension_semantics<arbitrary>], iteration_bounds = array<i64: 1>, scalar_prefetch = 0 : i64, scratch_operands = 0 : i64, tpu.core_type = #tpu.core_type<tc>, window_params = [{pipeline_mode = #tpu.pipeline_mode<synchronous>, transform_indices = @transform_0, window_bounds = array<i64: 64, 16>}, {pipeline_mode = #tpu.pipeline_mode<synchronous>, transform_indices = @transform_1, window_bounds = array<i64: 16, 128>}, {pipeline_mode = #tpu.pipeline_mode<synchronous>, transform_indices = @transform_2, window_bounds = array<i64: 32, 128>}, {pipeline_mode = #tpu.pipeline_mode<synchronous>, transform_indices = @transform_3, window_bounds = array<i64: 1, 128>}, {pipeline_mode = #tpu.pipeline_mode<synchronous>, transform_indices = @transform_4, window_bounds = array<i64: 32, 128>}, {pipeline_mode = #tpu.pipeline_mode<synchronous>, transform_indices = @transform_5, window_bounds = array<i64: 32, 128>}, {pipeline_mode = #tpu.pipeline_mode<synchronous>, transform_indices = @transform_6, window_bounds = array<i64: 1, 128>}, {pipeline_mode = #tpu.pipeline_mode<synchronous>, transform_indices = @transform_7, window_bounds = array<i64: 32, 8>}, {pipeline_mode = #tpu.pipeline_mode<synchronous>, transform_indices = @transform_8, window_bounds = array<i64: 1, 8>}, {pipeline_mode = #tpu.pipeline_mode<synchronous>, transform_indices = @transform_9, window_bounds = array<i64: 8, 8>}]} {
    %c0 = arith.constant 0 : index
    %c0_0 = arith.constant 0 : index
    %0 = vector.load %arg1[%c0, %c0_0] : memref<64x16xf32, #tpu.memory_space<vmem>>, vector<64x16xf32>
    %c0_1 = arith.constant 0 : index
    %c0_2 = arith.constant 0 : index
    %1 = vector.load %arg2[%c0_1, %c0_2] : memref<16x128xf32, #tpu.memory_space<vmem>>, vector<16x128xf32>
    %cst = arith.constant dense<0.000000e+00> : vector<64x128xf32>
    %2 = tpu.matmul %0, %1, %cst {dimension_numbers = #tpu.dot_dimension_numbers<[1], [0], [0], [1], [0, 0, 1, 1], [], []>} : vector<64x16xf32>, vector<16x128xf32>, vector<64x128xf32> -> vector<64x128xf32>
    %c0_3 = arith.constant 0 : index
    %c0_4 = arith.constant 0 : index
    %3 = vector.load %arg4[%c0_3, %c0_4] : memref<1x128xf32, #tpu.memory_space<vmem>>, vector<1x128xf32>
    %4 = vector.broadcast %3 : vector<1x128xf32> to vector<64x128xf32>
    %5 = arith.addf %2, %4 : vector<64x128xf32>
    %6 = tpu.iota {dimensions = array<i32: 1>} : vector<8x128xi32>
    %c64_i32 = arith.constant 64 : i32
    %7 = vector.broadcast %c64_i32 : i32 to vector<8x128xi32>
    %8 = arith.cmpi sge, %6, %7 : vector<8x128xi32>
    %c96_i32 = arith.constant 96 : i32
    %9 = vector.broadcast %c96_i32 : i32 to vector<8x128xi32>
    %10 = arith.cmpi slt, %6, %9 : vector<8x128xi32>
    %11 = arith.andi %8, %10 : vector<8x128xi1>
    %cst_5 = arith.constant 1.000000e+00 : f32
    %cst_6 = arith.constant 5.000000e-01 : f32
    %12 = vector.broadcast %cst_5 : f32 to vector<8x128xf32>
    %13 = vector.broadcast %cst_6 : f32 to vector<8x128xf32>
    %14 = arith.select %11, %12, %13 : vector<8x128xi1>, vector<8x128xf32>
    %cst_7 = arith.constant 0.000000e+00 : f32
    %cst_8 = arith.constant 5.000000e-01 : f32
    %15 = vector.broadcast %cst_7 : f32 to vector<8x128xf32>
    %16 = vector.broadcast %cst_8 : f32 to vector<8x128xf32>
    %17 = arith.select %11, %15, %16 : vector<8x128xi1>, vector<8x128xf32>
    %c0_9 = arith.constant 0 : index
    %c0_10 = arith.constant 0 : index
    %18 = vector.load %arg7[%c0_9, %c0_10] : memref<1x128xf32, #tpu.memory_space<vmem>>, vector<1x128xf32>
    %19 = vector.shape_cast %18 : vector<1x128xf32> to vector<1x128xf32>
    %20 = vector.broadcast %19 : vector<1x128xf32> to vector<8x128xf32>
    %cst_11 = arith.constant 0.000000e+00 : f32
    %21 = vector.broadcast %cst_11 : f32 to vector<8x32xf32>
    %cst_12 = arith.constant 0.000000e+00 : f32
    %22 = vector.broadcast %cst_12 : f32 to vector<8x32xf32>
    %cst_13 = arith.constant 0.000000e+00 : f32
    %23 = vector.broadcast %cst_13 : f32 to vector<8x32xf32>
    %cst_14 = arith.constant 0.000000e+00 : f32
    %24 = vector.broadcast %cst_14 : f32 to vector<8x32xf32>
    %c0_15 = arith.constant 0 : index
    %c0_16 = arith.constant 0 : index
    %25 = vector.load %arg3[%c0_15, %c0_16] : memref<32x128xf32, #tpu.memory_space<vmem>>, vector<32x128xf32>
    %cst_17 = arith.constant dense<0.000000e+00> : vector<8x128xf32>
    %26 = tpu.matmul %21, %25, %cst_17 {dimension_numbers = #tpu.dot_dimension_numbers<[1], [0], [0], [1], [0, 0, 1, 1], [], []>} : vector<8x32xf32>, vector<32x128xf32>, vector<8x128xf32> -> vector<8x128xf32>
    %c0_18 = arith.constant 0 : index
    %c0_19 = arith.constant 0 : index
    %27 = vector.load %arg6[%c0_18, %c0_19] : memref<32x128xf32, #tpu.memory_space<vmem>>, vector<32x128xf32>
    %cst_20 = arith.constant dense<0.000000e+00> : vector<8x128xf32>
    %28 = tpu.matmul %23, %27, %cst_20 {dimension_numbers = #tpu.dot_dimension_numbers<[1], [0], [0], [1], [0, 0, 1, 1], [], []>} : vector<8x32xf32>, vector<32x128xf32>, vector<8x128xf32> -> vector<8x128xf32>
    %29 = arith.addf %28, %20 : vector<8x128xf32>
    %30 = vector.extract_strided_slice %5 {offsets = [0, 0], sizes = [8, 128], strides = [1, 1]} : vector<64x128xf32> to vector<8x128xf32>
    %31 = arith.addf %30, %26 : vector<8x128xf32>
    %32 = arith.mulf %31, %14 : vector<8x128xf32>
    %33 = math.tanh %32 : vector<8x128xf32>
    %34 = arith.mulf %33, %14 : vector<8x128xf32>
    %35 = arith.addf %34, %17 : vector<8x128xf32>
    %36 = vector.extract_strided_slice %35 {offsets = [0, 0], sizes = [8, 32], strides = [1, 1]} : vector<8x128xf32> to vector<8x32xf32>
    %37 = vector.extract_strided_slice %35 {offsets = [0, 32], sizes = [8, 32], strides = [1, 1]} : vector<8x128xf32> to vector<8x32xf32>
    %38 = vector.extract_strided_slice %35 {offsets = [0, 64], sizes = [8, 32], strides = [1, 1]} : vector<8x128xf32> to vector<8x32xf32>
    %39 = vector.extract_strided_slice %35 {offsets = [0, 96], sizes = [8, 32], strides = [1, 1]} : vector<8x128xf32> to vector<8x32xf32>
    %40 = arith.mulf %37, %22 : vector<8x32xf32>
    %41 = arith.mulf %36, %38 : vector<8x32xf32>
    %42 = arith.addf %40, %41 : vector<8x32xf32>
    %43 = math.tanh %42 : vector<8x32xf32>
    %44 = arith.mulf %39, %43 : vector<8x32xf32>
    %c0_21 = arith.constant 0 : index
    %c0_22 = arith.constant 0 : index
    %45 = vector.load %arg5[%c0_21, %c0_22] : memref<32x128xf32, #tpu.memory_space<vmem>>, vector<32x128xf32>
    %cst_23 = arith.constant dense<0.000000e+00> : vector<8x128xf32>
    %46 = tpu.matmul %44, %45, %cst_23 {dimension_numbers = #tpu.dot_dimension_numbers<[1], [0], [0], [1], [0, 0, 1, 1], [], []>} : vector<8x32xf32>, vector<32x128xf32>, vector<8x128xf32> -> vector<8x128xf32>
    %47 = arith.addf %46, %29 : vector<8x128xf32>
    %48 = arith.mulf %47, %14 : vector<8x128xf32>
    %49 = math.tanh %48 : vector<8x128xf32>
    %50 = arith.mulf %49, %14 : vector<8x128xf32>
    %51 = arith.addf %50, %17 : vector<8x128xf32>
    %52 = vector.extract_strided_slice %51 {offsets = [0, 0], sizes = [8, 32], strides = [1, 1]} : vector<8x128xf32> to vector<8x32xf32>
    %53 = vector.extract_strided_slice %51 {offsets = [0, 32], sizes = [8, 32], strides = [1, 1]} : vector<8x128xf32> to vector<8x32xf32>
    %54 = vector.extract_strided_slice %51 {offsets = [0, 64], sizes = [8, 32], strides = [1, 1]} : vector<8x128xf32> to vector<8x32xf32>
    %55 = vector.extract_strided_slice %51 {offsets = [0, 96], sizes = [8, 32], strides = [1, 1]} : vector<8x128xf32> to vector<8x32xf32>
    %56 = arith.mulf %53, %24 : vector<8x32xf32>
    %57 = arith.mulf %52, %54 : vector<8x32xf32>
    %58 = arith.addf %56, %57 : vector<8x32xf32>
    %59 = math.tanh %58 : vector<8x32xf32>
    %60 = arith.mulf %55, %59 : vector<8x32xf32>
    %c0_24 = arith.constant 0 : index
    %c0_25 = arith.constant 0 : index
    %61 = vector.load %arg3[%c0_24, %c0_25] : memref<32x128xf32, #tpu.memory_space<vmem>>, vector<32x128xf32>
    %cst_26 = arith.constant dense<0.000000e+00> : vector<8x128xf32>
    %62 = tpu.matmul %44, %61, %cst_26 {dimension_numbers = #tpu.dot_dimension_numbers<[1], [0], [0], [1], [0, 0, 1, 1], [], []>} : vector<8x32xf32>, vector<32x128xf32>, vector<8x128xf32> -> vector<8x128xf32>
    %c0_27 = arith.constant 0 : index
    %c0_28 = arith.constant 0 : index
    %63 = vector.load %arg6[%c0_27, %c0_28] : memref<32x128xf32, #tpu.memory_space<vmem>>, vector<32x128xf32>
    %cst_29 = arith.constant dense<0.000000e+00> : vector<8x128xf32>
    %64 = tpu.matmul %60, %63, %cst_29 {dimension_numbers = #tpu.dot_dimension_numbers<[1], [0], [0], [1], [0, 0, 1, 1], [], []>} : vector<8x32xf32>, vector<32x128xf32>, vector<8x128xf32> -> vector<8x128xf32>
    %65 = arith.addf %64, %20 : vector<8x128xf32>
    %66 = vector.extract_strided_slice %5 {offsets = [8, 0], sizes = [8, 128], strides = [1, 1]} : vector<64x128xf32> to vector<8x128xf32>
    %67 = arith.addf %66, %62 : vector<8x128xf32>
    %68 = arith.mulf %67, %14 : vector<8x128xf32>
    %69 = math.tanh %68 : vector<8x128xf32>
    %70 = arith.mulf %69, %14 : vector<8x128xf32>
    %71 = arith.addf %70, %17 : vector<8x128xf32>
    %72 = vector.extract_strided_slice %71 {offsets = [0, 0], sizes = [8, 32], strides = [1, 1]} : vector<8x128xf32> to vector<8x32xf32>
    %73 = vector.extract_strided_slice %71 {offsets = [0, 32], sizes = [8, 32], strides = [1, 1]} : vector<8x128xf32> to vector<8x32xf32>
    %74 = vector.extract_strided_slice %71 {offsets = [0, 64], sizes = [8, 32], strides = [1, 1]} : vector<8x128xf32> to vector<8x32xf32>
    %75 = vector.extract_strided_slice %71 {offsets = [0, 96], sizes = [8, 32], strides = [1, 1]} : vector<8x128xf32> to vector<8x32xf32>
    %76 = arith.mulf %73, %42 : vector<8x32xf32>
    %77 = arith.mulf %72, %74 : vector<8x32xf32>
    %78 = arith.addf %76, %77 : vector<8x32xf32>
    %79 = math.tanh %78 : vector<8x32xf32>
    %80 = arith.mulf %75, %79 : vector<8x32xf32>
    %c0_30 = arith.constant 0 : index
    %c0_31 = arith.constant 0 : index
    %81 = vector.load %arg5[%c0_30, %c0_31] : memref<32x128xf32, #tpu.memory_space<vmem>>, vector<32x128xf32>
    %cst_32 = arith.constant dense<0.000000e+00> : vector<8x128xf32>
    %82 = tpu.matmul %80, %81, %cst_32 {dimension_numbers = #tpu.dot_dimension_numbers<[1], [0], [0], [1], [0, 0, 1, 1], [], []>} : vector<8x32xf32>, vector<32x128xf32>, vector<8x128xf32> -> vector<8x128xf32>
    %83 = arith.addf %82, %65 : vector<8x128xf32>
    %84 = arith.mulf %83, %14 : vector<8x128xf32>
    %85 = math.tanh %84 : vector<8x128xf32>
    %86 = arith.mulf %85, %14 : vector<8x128xf32>
    %87 = arith.addf %86, %17 : vector<8x128xf32>
    %88 = vector.extract_strided_slice %87 {offsets = [0, 0], sizes = [8, 32], strides = [1, 1]} : vector<8x128xf32> to vector<8x32xf32>
    %89 = vector.extract_strided_slice %87 {offsets = [0, 32], sizes = [8, 32], strides = [1, 1]} : vector<8x128xf32> to vector<8x32xf32>
    %90 = vector.extract_strided_slice %87 {offsets = [0, 64], sizes = [8, 32], strides = [1, 1]} : vector<8x128xf32> to vector<8x32xf32>
    %91 = vector.extract_strided_slice %87 {offsets = [0, 96], sizes = [8, 32], strides = [1, 1]} : vector<8x128xf32> to vector<8x32xf32>
    %92 = arith.mulf %89, %58 : vector<8x32xf32>
    %93 = arith.mulf %88, %90 : vector<8x32xf32>
    %94 = arith.addf %92, %93 : vector<8x32xf32>
    %95 = math.tanh %94 : vector<8x32xf32>
    %96 = arith.mulf %91, %95 : vector<8x32xf32>
    %c0_33 = arith.constant 0 : index
    %c0_34 = arith.constant 0 : index
    %97 = vector.load %arg3[%c0_33, %c0_34] : memref<32x128xf32, #tpu.memory_space<vmem>>, vector<32x128xf32>
    %cst_35 = arith.constant dense<0.000000e+00> : vector<8x128xf32>
    %98 = tpu.matmul %80, %97, %cst_35 {dimension_numbers = #tpu.dot_dimension_numbers<[1], [0], [0], [1], [0, 0, 1, 1], [], []>} : vector<8x32xf32>, vector<32x128xf32>, vector<8x128xf32> -> vector<8x128xf32>
    %c0_36 = arith.constant 0 : index
    %c0_37 = arith.constant 0 : index
    %99 = vector.load %arg6[%c0_36, %c0_37] : memref<32x128xf32, #tpu.memory_space<vmem>>, vector<32x128xf32>
    %cst_38 = arith.constant dense<0.000000e+00> : vector<8x128xf32>
    %100 = tpu.matmul %96, %99, %cst_38 {dimension_numbers = #tpu.dot_dimension_numbers<[1], [0], [0], [1], [0, 0, 1, 1], [], []>} : vector<8x32xf32>, vector<32x128xf32>, vector<8x128xf32> -> vector<8x128xf32>
    %101 = arith.addf %100, %20 : vector<8x128xf32>
    %102 = vector.extract_strided_slice %5 {offsets = [16, 0], sizes = [8, 128], strides = [1, 1]} : vector<64x128xf32> to vector<8x128xf32>
    %103 = arith.addf %102, %98 : vector<8x128xf32>
    %104 = arith.mulf %103, %14 : vector<8x128xf32>
    %105 = math.tanh %104 : vector<8x128xf32>
    %106 = arith.mulf %105, %14 : vector<8x128xf32>
    %107 = arith.addf %106, %17 : vector<8x128xf32>
    %108 = vector.extract_strided_slice %107 {offsets = [0, 0], sizes = [8, 32], strides = [1, 1]} : vector<8x128xf32> to vector<8x32xf32>
    %109 = vector.extract_strided_slice %107 {offsets = [0, 32], sizes = [8, 32], strides = [1, 1]} : vector<8x128xf32> to vector<8x32xf32>
    %110 = vector.extract_strided_slice %107 {offsets = [0, 64], sizes = [8, 32], strides = [1, 1]} : vector<8x128xf32> to vector<8x32xf32>
    %111 = vector.extract_strided_slice %107 {offsets = [0, 96], sizes = [8, 32], strides = [1, 1]} : vector<8x128xf32> to vector<8x32xf32>
    %112 = arith.mulf %109, %78 : vector<8x32xf32>
    %113 = arith.mulf %108, %110 : vector<8x32xf32>
    %114 = arith.addf %112, %113 : vector<8x32xf32>
    %115 = math.tanh %114 : vector<8x32xf32>
    %116 = arith.mulf %111, %115 : vector<8x32xf32>
    %c0_39 = arith.constant 0 : index
    %c0_40 = arith.constant 0 : index
    %117 = vector.load %arg5[%c0_39, %c0_40] : memref<32x128xf32, #tpu.memory_space<vmem>>, vector<32x128xf32>
    %cst_41 = arith.constant dense<0.000000e+00> : vector<8x128xf32>
    %118 = tpu.matmul %116, %117, %cst_41 {dimension_numbers = #tpu.dot_dimension_numbers<[1], [0], [0], [1], [0, 0, 1, 1], [], []>} : vector<8x32xf32>, vector<32x128xf32>, vector<8x128xf32> -> vector<8x128xf32>
    %119 = arith.addf %118, %101 : vector<8x128xf32>
    %120 = arith.mulf %119, %14 : vector<8x128xf32>
    %121 = math.tanh %120 : vector<8x128xf32>
    %122 = arith.mulf %121, %14 : vector<8x128xf32>
    %123 = arith.addf %122, %17 : vector<8x128xf32>
    %124 = vector.extract_strided_slice %123 {offsets = [0, 0], sizes = [8, 32], strides = [1, 1]} : vector<8x128xf32> to vector<8x32xf32>
    %125 = vector.extract_strided_slice %123 {offsets = [0, 32], sizes = [8, 32], strides = [1, 1]} : vector<8x128xf32> to vector<8x32xf32>
    %126 = vector.extract_strided_slice %123 {offsets = [0, 64], sizes = [8, 32], strides = [1, 1]} : vector<8x128xf32> to vector<8x32xf32>
    %127 = vector.extract_strided_slice %123 {offsets = [0, 96], sizes = [8, 32], strides = [1, 1]} : vector<8x128xf32> to vector<8x32xf32>
    %128 = arith.mulf %125, %94 : vector<8x32xf32>
    %129 = arith.mulf %124, %126 : vector<8x32xf32>
    %130 = arith.addf %128, %129 : vector<8x32xf32>
    %131 = math.tanh %130 : vector<8x32xf32>
    %132 = arith.mulf %127, %131 : vector<8x32xf32>
    %c0_42 = arith.constant 0 : index
    %c0_43 = arith.constant 0 : index
    %133 = vector.load %arg3[%c0_42, %c0_43] : memref<32x128xf32, #tpu.memory_space<vmem>>, vector<32x128xf32>
    %cst_44 = arith.constant dense<0.000000e+00> : vector<8x128xf32>
    %134 = tpu.matmul %116, %133, %cst_44 {dimension_numbers = #tpu.dot_dimension_numbers<[1], [0], [0], [1], [0, 0, 1, 1], [], []>} : vector<8x32xf32>, vector<32x128xf32>, vector<8x128xf32> -> vector<8x128xf32>
    %c0_45 = arith.constant 0 : index
    %c0_46 = arith.constant 0 : index
    %135 = vector.load %arg6[%c0_45, %c0_46] : memref<32x128xf32, #tpu.memory_space<vmem>>, vector<32x128xf32>
    %cst_47 = arith.constant dense<0.000000e+00> : vector<8x128xf32>
    %136 = tpu.matmul %132, %135, %cst_47 {dimension_numbers = #tpu.dot_dimension_numbers<[1], [0], [0], [1], [0, 0, 1, 1], [], []>} : vector<8x32xf32>, vector<32x128xf32>, vector<8x128xf32> -> vector<8x128xf32>
    %137 = arith.addf %136, %20 : vector<8x128xf32>
    %138 = vector.extract_strided_slice %5 {offsets = [24, 0], sizes = [8, 128], strides = [1, 1]} : vector<64x128xf32> to vector<8x128xf32>
    %139 = arith.addf %138, %134 : vector<8x128xf32>
    %140 = arith.mulf %139, %14 : vector<8x128xf32>
    %141 = math.tanh %140 : vector<8x128xf32>
    %142 = arith.mulf %141, %14 : vector<8x128xf32>
    %143 = arith.addf %142, %17 : vector<8x128xf32>
    %144 = vector.extract_strided_slice %143 {offsets = [0, 0], sizes = [8, 32], strides = [1, 1]} : vector<8x128xf32> to vector<8x32xf32>
    %145 = vector.extract_strided_slice %143 {offsets = [0, 32], sizes = [8, 32], strides = [1, 1]} : vector<8x128xf32> to vector<8x32xf32>
    %146 = vector.extract_strided_slice %143 {offsets = [0, 64], sizes = [8, 32], strides = [1, 1]} : vector<8x128xf32> to vector<8x32xf32>
    %147 = vector.extract_strided_slice %143 {offsets = [0, 96], sizes = [8, 32], strides = [1, 1]} : vector<8x128xf32> to vector<8x32xf32>
    %148 = arith.mulf %145, %114 : vector<8x32xf32>
    %149 = arith.mulf %144, %146 : vector<8x32xf32>
    %150 = arith.addf %148, %149 : vector<8x32xf32>
    %151 = math.tanh %150 : vector<8x32xf32>
    %152 = arith.mulf %147, %151 : vector<8x32xf32>
    %c0_48 = arith.constant 0 : index
    %c0_49 = arith.constant 0 : index
    %153 = vector.load %arg5[%c0_48, %c0_49] : memref<32x128xf32, #tpu.memory_space<vmem>>, vector<32x128xf32>
    %cst_50 = arith.constant dense<0.000000e+00> : vector<8x128xf32>
    %154 = tpu.matmul %152, %153, %cst_50 {dimension_numbers = #tpu.dot_dimension_numbers<[1], [0], [0], [1], [0, 0, 1, 1], [], []>} : vector<8x32xf32>, vector<32x128xf32>, vector<8x128xf32> -> vector<8x128xf32>
    %155 = arith.addf %154, %137 : vector<8x128xf32>
    %156 = arith.mulf %155, %14 : vector<8x128xf32>
    %157 = math.tanh %156 : vector<8x128xf32>
    %158 = arith.mulf %157, %14 : vector<8x128xf32>
    %159 = arith.addf %158, %17 : vector<8x128xf32>
    %160 = vector.extract_strided_slice %159 {offsets = [0, 0], sizes = [8, 32], strides = [1, 1]} : vector<8x128xf32> to vector<8x32xf32>
    %161 = vector.extract_strided_slice %159 {offsets = [0, 32], sizes = [8, 32], strides = [1, 1]} : vector<8x128xf32> to vector<8x32xf32>
    %162 = vector.extract_strided_slice %159 {offsets = [0, 64], sizes = [8, 32], strides = [1, 1]} : vector<8x128xf32> to vector<8x32xf32>
    %163 = vector.extract_strided_slice %159 {offsets = [0, 96], sizes = [8, 32], strides = [1, 1]} : vector<8x128xf32> to vector<8x32xf32>
    %164 = arith.mulf %161, %130 : vector<8x32xf32>
    %165 = arith.mulf %160, %162 : vector<8x32xf32>
    %166 = arith.addf %164, %165 : vector<8x32xf32>
    %167 = math.tanh %166 : vector<8x32xf32>
    %168 = arith.mulf %163, %167 : vector<8x32xf32>
    %c0_51 = arith.constant 0 : index
    %c0_52 = arith.constant 0 : index
    %169 = vector.load %arg3[%c0_51, %c0_52] : memref<32x128xf32, #tpu.memory_space<vmem>>, vector<32x128xf32>
    %cst_53 = arith.constant dense<0.000000e+00> : vector<8x128xf32>
    %170 = tpu.matmul %152, %169, %cst_53 {dimension_numbers = #tpu.dot_dimension_numbers<[1], [0], [0], [1], [0, 0, 1, 1], [], []>} : vector<8x32xf32>, vector<32x128xf32>, vector<8x128xf32> -> vector<8x128xf32>
    %c0_54 = arith.constant 0 : index
    %c0_55 = arith.constant 0 : index
    %171 = vector.load %arg6[%c0_54, %c0_55] : memref<32x128xf32, #tpu.memory_space<vmem>>, vector<32x128xf32>
    %cst_56 = arith.constant dense<0.000000e+00> : vector<8x128xf32>
    %172 = tpu.matmul %168, %171, %cst_56 {dimension_numbers = #tpu.dot_dimension_numbers<[1], [0], [0], [1], [0, 0, 1, 1], [], []>} : vector<8x32xf32>, vector<32x128xf32>, vector<8x128xf32> -> vector<8x128xf32>
    %173 = arith.addf %172, %20 : vector<8x128xf32>
    %174 = vector.extract_strided_slice %5 {offsets = [32, 0], sizes = [8, 128], strides = [1, 1]} : vector<64x128xf32> to vector<8x128xf32>
    %175 = arith.addf %174, %170 : vector<8x128xf32>
    %176 = arith.mulf %175, %14 : vector<8x128xf32>
    %177 = math.tanh %176 : vector<8x128xf32>
    %178 = arith.mulf %177, %14 : vector<8x128xf32>
    %179 = arith.addf %178, %17 : vector<8x128xf32>
    %180 = vector.extract_strided_slice %179 {offsets = [0, 0], sizes = [8, 32], strides = [1, 1]} : vector<8x128xf32> to vector<8x32xf32>
    %181 = vector.extract_strided_slice %179 {offsets = [0, 32], sizes = [8, 32], strides = [1, 1]} : vector<8x128xf32> to vector<8x32xf32>
    %182 = vector.extract_strided_slice %179 {offsets = [0, 64], sizes = [8, 32], strides = [1, 1]} : vector<8x128xf32> to vector<8x32xf32>
    %183 = vector.extract_strided_slice %179 {offsets = [0, 96], sizes = [8, 32], strides = [1, 1]} : vector<8x128xf32> to vector<8x32xf32>
    %184 = arith.mulf %181, %150 : vector<8x32xf32>
    %185 = arith.mulf %180, %182 : vector<8x32xf32>
    %186 = arith.addf %184, %185 : vector<8x32xf32>
    %187 = math.tanh %186 : vector<8x32xf32>
    %188 = arith.mulf %183, %187 : vector<8x32xf32>
    %c0_57 = arith.constant 0 : index
    %c0_58 = arith.constant 0 : index
    %189 = vector.load %arg5[%c0_57, %c0_58] : memref<32x128xf32, #tpu.memory_space<vmem>>, vector<32x128xf32>
    %cst_59 = arith.constant dense<0.000000e+00> : vector<8x128xf32>
    %190 = tpu.matmul %188, %189, %cst_59 {dimension_numbers = #tpu.dot_dimension_numbers<[1], [0], [0], [1], [0, 0, 1, 1], [], []>} : vector<8x32xf32>, vector<32x128xf32>, vector<8x128xf32> -> vector<8x128xf32>
    %191 = arith.addf %190, %173 : vector<8x128xf32>
    %192 = arith.mulf %191, %14 : vector<8x128xf32>
    %193 = math.tanh %192 : vector<8x128xf32>
    %194 = arith.mulf %193, %14 : vector<8x128xf32>
    %195 = arith.addf %194, %17 : vector<8x128xf32>
    %196 = vector.extract_strided_slice %195 {offsets = [0, 0], sizes = [8, 32], strides = [1, 1]} : vector<8x128xf32> to vector<8x32xf32>
    %197 = vector.extract_strided_slice %195 {offsets = [0, 32], sizes = [8, 32], strides = [1, 1]} : vector<8x128xf32> to vector<8x32xf32>
    %198 = vector.extract_strided_slice %195 {offsets = [0, 64], sizes = [8, 32], strides = [1, 1]} : vector<8x128xf32> to vector<8x32xf32>
    %199 = vector.extract_strided_slice %195 {offsets = [0, 96], sizes = [8, 32], strides = [1, 1]} : vector<8x128xf32> to vector<8x32xf32>
    %200 = arith.mulf %197, %166 : vector<8x32xf32>
    %201 = arith.mulf %196, %198 : vector<8x32xf32>
    %202 = arith.addf %200, %201 : vector<8x32xf32>
    %203 = math.tanh %202 : vector<8x32xf32>
    %204 = arith.mulf %199, %203 : vector<8x32xf32>
    %c0_60 = arith.constant 0 : index
    %c0_61 = arith.constant 0 : index
    %205 = vector.load %arg3[%c0_60, %c0_61] : memref<32x128xf32, #tpu.memory_space<vmem>>, vector<32x128xf32>
    %cst_62 = arith.constant dense<0.000000e+00> : vector<8x128xf32>
    %206 = tpu.matmul %188, %205, %cst_62 {dimension_numbers = #tpu.dot_dimension_numbers<[1], [0], [0], [1], [0, 0, 1, 1], [], []>} : vector<8x32xf32>, vector<32x128xf32>, vector<8x128xf32> -> vector<8x128xf32>
    %c0_63 = arith.constant 0 : index
    %c0_64 = arith.constant 0 : index
    %207 = vector.load %arg6[%c0_63, %c0_64] : memref<32x128xf32, #tpu.memory_space<vmem>>, vector<32x128xf32>
    %cst_65 = arith.constant dense<0.000000e+00> : vector<8x128xf32>
    %208 = tpu.matmul %204, %207, %cst_65 {dimension_numbers = #tpu.dot_dimension_numbers<[1], [0], [0], [1], [0, 0, 1, 1], [], []>} : vector<8x32xf32>, vector<32x128xf32>, vector<8x128xf32> -> vector<8x128xf32>
    %209 = arith.addf %208, %20 : vector<8x128xf32>
    %210 = vector.extract_strided_slice %5 {offsets = [40, 0], sizes = [8, 128], strides = [1, 1]} : vector<64x128xf32> to vector<8x128xf32>
    %211 = arith.addf %210, %206 : vector<8x128xf32>
    %212 = arith.mulf %211, %14 : vector<8x128xf32>
    %213 = math.tanh %212 : vector<8x128xf32>
    %214 = arith.mulf %213, %14 : vector<8x128xf32>
    %215 = arith.addf %214, %17 : vector<8x128xf32>
    %216 = vector.extract_strided_slice %215 {offsets = [0, 0], sizes = [8, 32], strides = [1, 1]} : vector<8x128xf32> to vector<8x32xf32>
    %217 = vector.extract_strided_slice %215 {offsets = [0, 32], sizes = [8, 32], strides = [1, 1]} : vector<8x128xf32> to vector<8x32xf32>
    %218 = vector.extract_strided_slice %215 {offsets = [0, 64], sizes = [8, 32], strides = [1, 1]} : vector<8x128xf32> to vector<8x32xf32>
    %219 = vector.extract_strided_slice %215 {offsets = [0, 96], sizes = [8, 32], strides = [1, 1]} : vector<8x128xf32> to vector<8x32xf32>
    %220 = arith.mulf %217, %186 : vector<8x32xf32>
    %221 = arith.mulf %216, %218 : vector<8x32xf32>
    %222 = arith.addf %220, %221 : vector<8x32xf32>
    %223 = math.tanh %222 : vector<8x32xf32>
    %224 = arith.mulf %219, %223 : vector<8x32xf32>
    %c0_66 = arith.constant 0 : index
    %c0_67 = arith.constant 0 : index
    %225 = vector.load %arg5[%c0_66, %c0_67] : memref<32x128xf32, #tpu.memory_space<vmem>>, vector<32x128xf32>
    %cst_68 = arith.constant dense<0.000000e+00> : vector<8x128xf32>
    %226 = tpu.matmul %224, %225, %cst_68 {dimension_numbers = #tpu.dot_dimension_numbers<[1], [0], [0], [1], [0, 0, 1, 1], [], []>} : vector<8x32xf32>, vector<32x128xf32>, vector<8x128xf32> -> vector<8x128xf32>
    %227 = arith.addf %226, %209 : vector<8x128xf32>
    %228 = arith.mulf %227, %14 : vector<8x128xf32>
    %229 = math.tanh %228 : vector<8x128xf32>
    %230 = arith.mulf %229, %14 : vector<8x128xf32>
    %231 = arith.addf %230, %17 : vector<8x128xf32>
    %232 = vector.extract_strided_slice %231 {offsets = [0, 0], sizes = [8, 32], strides = [1, 1]} : vector<8x128xf32> to vector<8x32xf32>
    %233 = vector.extract_strided_slice %231 {offsets = [0, 32], sizes = [8, 32], strides = [1, 1]} : vector<8x128xf32> to vector<8x32xf32>
    %234 = vector.extract_strided_slice %231 {offsets = [0, 64], sizes = [8, 32], strides = [1, 1]} : vector<8x128xf32> to vector<8x32xf32>
    %235 = vector.extract_strided_slice %231 {offsets = [0, 96], sizes = [8, 32], strides = [1, 1]} : vector<8x128xf32> to vector<8x32xf32>
    %236 = arith.mulf %233, %202 : vector<8x32xf32>
    %237 = arith.mulf %232, %234 : vector<8x32xf32>
    %238 = arith.addf %236, %237 : vector<8x32xf32>
    %239 = math.tanh %238 : vector<8x32xf32>
    %240 = arith.mulf %235, %239 : vector<8x32xf32>
    %c0_69 = arith.constant 0 : index
    %c0_70 = arith.constant 0 : index
    %241 = vector.load %arg3[%c0_69, %c0_70] : memref<32x128xf32, #tpu.memory_space<vmem>>, vector<32x128xf32>
    %cst_71 = arith.constant dense<0.000000e+00> : vector<8x128xf32>
    %242 = tpu.matmul %224, %241, %cst_71 {dimension_numbers = #tpu.dot_dimension_numbers<[1], [0], [0], [1], [0, 0, 1, 1], [], []>} : vector<8x32xf32>, vector<32x128xf32>, vector<8x128xf32> -> vector<8x128xf32>
    %c0_72 = arith.constant 0 : index
    %c0_73 = arith.constant 0 : index
    %243 = vector.load %arg6[%c0_72, %c0_73] : memref<32x128xf32, #tpu.memory_space<vmem>>, vector<32x128xf32>
    %cst_74 = arith.constant dense<0.000000e+00> : vector<8x128xf32>
    %244 = tpu.matmul %240, %243, %cst_74 {dimension_numbers = #tpu.dot_dimension_numbers<[1], [0], [0], [1], [0, 0, 1, 1], [], []>} : vector<8x32xf32>, vector<32x128xf32>, vector<8x128xf32> -> vector<8x128xf32>
    %245 = arith.addf %244, %20 : vector<8x128xf32>
    %246 = vector.extract_strided_slice %5 {offsets = [48, 0], sizes = [8, 128], strides = [1, 1]} : vector<64x128xf32> to vector<8x128xf32>
    %247 = arith.addf %246, %242 : vector<8x128xf32>
    %248 = arith.mulf %247, %14 : vector<8x128xf32>
    %249 = math.tanh %248 : vector<8x128xf32>
    %250 = arith.mulf %249, %14 : vector<8x128xf32>
    %251 = arith.addf %250, %17 : vector<8x128xf32>
    %252 = vector.extract_strided_slice %251 {offsets = [0, 0], sizes = [8, 32], strides = [1, 1]} : vector<8x128xf32> to vector<8x32xf32>
    %253 = vector.extract_strided_slice %251 {offsets = [0, 32], sizes = [8, 32], strides = [1, 1]} : vector<8x128xf32> to vector<8x32xf32>
    %254 = vector.extract_strided_slice %251 {offsets = [0, 64], sizes = [8, 32], strides = [1, 1]} : vector<8x128xf32> to vector<8x32xf32>
    %255 = vector.extract_strided_slice %251 {offsets = [0, 96], sizes = [8, 32], strides = [1, 1]} : vector<8x128xf32> to vector<8x32xf32>
    %256 = arith.mulf %253, %222 : vector<8x32xf32>
    %257 = arith.mulf %252, %254 : vector<8x32xf32>
    %258 = arith.addf %256, %257 : vector<8x32xf32>
    %259 = math.tanh %258 : vector<8x32xf32>
    %260 = arith.mulf %255, %259 : vector<8x32xf32>
    %c0_75 = arith.constant 0 : index
    %c0_76 = arith.constant 0 : index
    %261 = vector.load %arg5[%c0_75, %c0_76] : memref<32x128xf32, #tpu.memory_space<vmem>>, vector<32x128xf32>
    %cst_77 = arith.constant dense<0.000000e+00> : vector<8x128xf32>
    %262 = tpu.matmul %260, %261, %cst_77 {dimension_numbers = #tpu.dot_dimension_numbers<[1], [0], [0], [1], [0, 0, 1, 1], [], []>} : vector<8x32xf32>, vector<32x128xf32>, vector<8x128xf32> -> vector<8x128xf32>
    %263 = arith.addf %262, %245 : vector<8x128xf32>
    %264 = arith.mulf %263, %14 : vector<8x128xf32>
    %265 = math.tanh %264 : vector<8x128xf32>
    %266 = arith.mulf %265, %14 : vector<8x128xf32>
    %267 = arith.addf %266, %17 : vector<8x128xf32>
    %268 = vector.extract_strided_slice %267 {offsets = [0, 0], sizes = [8, 32], strides = [1, 1]} : vector<8x128xf32> to vector<8x32xf32>
    %269 = vector.extract_strided_slice %267 {offsets = [0, 32], sizes = [8, 32], strides = [1, 1]} : vector<8x128xf32> to vector<8x32xf32>
    %270 = vector.extract_strided_slice %267 {offsets = [0, 64], sizes = [8, 32], strides = [1, 1]} : vector<8x128xf32> to vector<8x32xf32>
    %271 = vector.extract_strided_slice %267 {offsets = [0, 96], sizes = [8, 32], strides = [1, 1]} : vector<8x128xf32> to vector<8x32xf32>
    %272 = arith.mulf %269, %238 : vector<8x32xf32>
    %273 = arith.mulf %268, %270 : vector<8x32xf32>
    %274 = arith.addf %272, %273 : vector<8x32xf32>
    %275 = math.tanh %274 : vector<8x32xf32>
    %276 = arith.mulf %271, %275 : vector<8x32xf32>
    %c0_78 = arith.constant 0 : index
    %c0_79 = arith.constant 0 : index
    %277 = vector.load %arg3[%c0_78, %c0_79] : memref<32x128xf32, #tpu.memory_space<vmem>>, vector<32x128xf32>
    %cst_80 = arith.constant dense<0.000000e+00> : vector<8x128xf32>
    %278 = tpu.matmul %260, %277, %cst_80 {dimension_numbers = #tpu.dot_dimension_numbers<[1], [0], [0], [1], [0, 0, 1, 1], [], []>} : vector<8x32xf32>, vector<32x128xf32>, vector<8x128xf32> -> vector<8x128xf32>
    %c0_81 = arith.constant 0 : index
    %c0_82 = arith.constant 0 : index
    %279 = vector.load %arg6[%c0_81, %c0_82] : memref<32x128xf32, #tpu.memory_space<vmem>>, vector<32x128xf32>
    %cst_83 = arith.constant dense<0.000000e+00> : vector<8x128xf32>
    %280 = tpu.matmul %276, %279, %cst_83 {dimension_numbers = #tpu.dot_dimension_numbers<[1], [0], [0], [1], [0, 0, 1, 1], [], []>} : vector<8x32xf32>, vector<32x128xf32>, vector<8x128xf32> -> vector<8x128xf32>
    %281 = arith.addf %280, %20 : vector<8x128xf32>
    %282 = vector.extract_strided_slice %5 {offsets = [56, 0], sizes = [8, 128], strides = [1, 1]} : vector<64x128xf32> to vector<8x128xf32>
    %283 = arith.addf %282, %278 : vector<8x128xf32>
    %284 = arith.mulf %283, %14 : vector<8x128xf32>
    %285 = math.tanh %284 : vector<8x128xf32>
    %286 = arith.mulf %285, %14 : vector<8x128xf32>
    %287 = arith.addf %286, %17 : vector<8x128xf32>
    %288 = vector.extract_strided_slice %287 {offsets = [0, 0], sizes = [8, 32], strides = [1, 1]} : vector<8x128xf32> to vector<8x32xf32>
    %289 = vector.extract_strided_slice %287 {offsets = [0, 32], sizes = [8, 32], strides = [1, 1]} : vector<8x128xf32> to vector<8x32xf32>
    %290 = vector.extract_strided_slice %287 {offsets = [0, 64], sizes = [8, 32], strides = [1, 1]} : vector<8x128xf32> to vector<8x32xf32>
    %291 = vector.extract_strided_slice %287 {offsets = [0, 96], sizes = [8, 32], strides = [1, 1]} : vector<8x128xf32> to vector<8x32xf32>
    %292 = arith.mulf %289, %258 : vector<8x32xf32>
    %293 = arith.mulf %288, %290 : vector<8x32xf32>
    %294 = arith.addf %292, %293 : vector<8x32xf32>
    %295 = math.tanh %294 : vector<8x32xf32>
    %296 = arith.mulf %291, %295 : vector<8x32xf32>
    %c0_84 = arith.constant 0 : index
    %c0_85 = arith.constant 0 : index
    %297 = vector.load %arg5[%c0_84, %c0_85] : memref<32x128xf32, #tpu.memory_space<vmem>>, vector<32x128xf32>
    %cst_86 = arith.constant dense<0.000000e+00> : vector<8x128xf32>
    %298 = tpu.matmul %296, %297, %cst_86 {dimension_numbers = #tpu.dot_dimension_numbers<[1], [0], [0], [1], [0, 0, 1, 1], [], []>} : vector<8x32xf32>, vector<32x128xf32>, vector<8x128xf32> -> vector<8x128xf32>
    %299 = arith.addf %298, %281 : vector<8x128xf32>
    %300 = arith.mulf %299, %14 : vector<8x128xf32>
    %301 = math.tanh %300 : vector<8x128xf32>
    %302 = arith.mulf %301, %14 : vector<8x128xf32>
    %303 = arith.addf %302, %17 : vector<8x128xf32>
    %304 = vector.extract_strided_slice %303 {offsets = [0, 0], sizes = [8, 32], strides = [1, 1]} : vector<8x128xf32> to vector<8x32xf32>
    %305 = vector.extract_strided_slice %303 {offsets = [0, 32], sizes = [8, 32], strides = [1, 1]} : vector<8x128xf32> to vector<8x32xf32>
    %306 = vector.extract_strided_slice %303 {offsets = [0, 64], sizes = [8, 32], strides = [1, 1]} : vector<8x128xf32> to vector<8x32xf32>
    %307 = vector.extract_strided_slice %303 {offsets = [0, 96], sizes = [8, 32], strides = [1, 1]} : vector<8x128xf32> to vector<8x32xf32>
    %308 = arith.mulf %305, %274 : vector<8x32xf32>
    %309 = arith.mulf %304, %306 : vector<8x32xf32>
    %310 = arith.addf %308, %309 : vector<8x32xf32>
    %311 = math.tanh %310 : vector<8x32xf32>
    %312 = arith.mulf %307, %311 : vector<8x32xf32>
    %c0_87 = arith.constant 0 : index
    %c0_88 = arith.constant 0 : index
    %313 = vector.load %arg8[%c0_87, %c0_88] : memref<32x8xf32, #tpu.memory_space<vmem>>, vector<32x8xf32>
    %cst_89 = arith.constant dense<0.000000e+00> : vector<8x8xf32>
    %314 = tpu.matmul %312, %313, %cst_89 {dimension_numbers = #tpu.dot_dimension_numbers<[1], [0], [0], [1], [0, 0, 1, 1], [], []>} : vector<8x32xf32>, vector<32x8xf32>, vector<8x8xf32> -> vector<8x8xf32>
    %c0_90 = arith.constant 0 : index
    %c0_91 = arith.constant 0 : index
    %315 = vector.load %arg9[%c0_90, %c0_91] : memref<1x8xf32, #tpu.memory_space<vmem>>, vector<1x8xf32>
    %316 = vector.broadcast %315 : vector<1x8xf32> to vector<8x8xf32>
    %317 = arith.addf %314, %316 : vector<8x8xf32>
    %c0_92 = arith.constant 0 : index
    %c0_93 = arith.constant 0 : index
    %318 = vector.load %arg10[%c0_92, %c0_93] : memref<8x8xf32, #tpu.memory_space<vmem>>, vector<8x8xf32>
    tpu.vector_store %arg10[%c0_92, %c0_93], %317 {strides = array<i32>} : memref<8x8xf32, #tpu.memory_space<vmem>>, vector<8x8xf32>,
    return
  }
  func.func @transform_0(%arg0: i32) -> (i32, i32) {
    %c0_i32 = arith.constant 0 : i32
    %c0_i32_0 = arith.constant 0 : i32
    %c0_i32_1 = arith.constant 0 : i32
    return %c0_i32, %c0_i32_0 : i32, i32
  }
  func.func @transform_1(%arg0: i32) -> (i32, i32) {
    %c0_i32 = arith.constant 0 : i32
    %c0_i32_0 = arith.constant 0 : i32
    %c0_i32_1 = arith.constant 0 : i32
    return %c0_i32, %c0_i32_0 : i32, i32
  }
  func.func @transform_2(%arg0: i32) -> (i32, i32) {
    %c0_i32 = arith.constant 0 : i32
    %c0_i32_0 = arith.constant 0 : i32
    %c0_i32_1 = arith.constant 0 : i32
    return %c0_i32, %c0_i32_0 : i32, i32
  }
  func.func @transform_3(%arg0: i32) -> (i32, i32) {
    %c0_i32 = arith.constant 0 : i32
    %c0_i32_0 = arith.constant 0 : i32
    %c0_i32_1 = arith.constant 0 : i32
    return %c0_i32, %c0_i32_0 : i32, i32
  }
  func.func @transform_4(%arg0: i32) -> (i32, i32) {
    %c0_i32 = arith.constant 0 : i32
    %c0_i32_0 = arith.constant 0 : i32
    %c0_i32_1 = arith.constant 0 : i32
    return %c0_i32, %c0_i32_0 : i32, i32
  }
  func.func @transform_5(%arg0: i32) -> (i32, i32) {
    %c0_i32 = arith.constant 0 : i32
    %c0_i32_0 = arith.constant 0 : i32
    %c0_i32_1 = arith.constant 0 : i32
    return %c0_i32, %c0_i32_0 : i32, i32
  }
  func.func @transform_6(%arg0: i32) -> (i32, i32) {
    %c0_i32 = arith.constant 0 : i32
    %c0_i32_0 = arith.constant 0 : i32
    %c0_i32_1 = arith.constant 0 : i32
    return %c0_i32, %c0_i32_0 : i32, i32
  }
  func.func @transform_7(%arg0: i32) -> (i32, i32) {
    %c0_i32 = arith.constant 0 : i32
    %c0_i32_0 = arith.constant 0 : i32
    %c0_i32_1 = arith.constant 0 : i32
    return %c0_i32, %c0_i32_0 : i32, i32
  }
  func.func @transform_8(%arg0: i32) -> (i32, i32) {
    %c0_i32 = arith.constant 0 : i32
    %c0_i32_0 = arith.constant 0 : i32
    %c0_i32_1 = arith.constant 0 : i32
    return %c0_i32, %c0_i32_0 : i32, i32
  }
  func.func @transform_9(%arg0: i32) -> (i32, i32) {
    %c0_i32 = arith.constant 0 : i32
    %c0_i32_0 = arith.constant 0 : i32
    %c0_i32_1 = arith.constant 0 : i32
    return %c0_i32, %c0_i32_0 : i32, i32
  }
}

</mosaic_0001>

<llo_original>
// kernel: tpu_custom_call.1
$region0: #{tpu_custom_call.1}
  #allocation0 [shape = 'u32[]', space=smem, size = 0x4, offset = 0x4, fixed_abs, tag = 'smem constant byte address 0x4 - core index']
  #allocation1 [shape = 'u32[144,128]{1,0:T(1,128)}', space=vmem, size = 0x12000, scoped, tag = 'internal scratch']
  %s0 = inlined_call_operand.vmem [shape: f32[64,16], index: 0, kind: input, shape index: {}]
  %s1 = inlined_call_operand.vmem [shape: f32[16,128], index: 1, kind: input, shape index: {}]
  %s2 = inlined_call_operand.vmem [shape: f32[32,128], index: 2, kind: input, shape index: {}]
  %s3 = inlined_call_operand.vmem [shape: f32[1,128], index: 3, kind: input, shape index: {}]
  %s4 = inlined_call_operand.vmem [shape: f32[32,128], index: 4, kind: input, shape index: {}]
  %s5 = inlined_call_operand.vmem [shape: f32[32,128], index: 5, kind: input, shape index: {}]
  %s6 = inlined_call_operand.vmem [shape: f32[1,128], index: 6, kind: input, shape index: {}]
  %s7 = inlined_call_operand.vmem [shape: f32[32,8], index: 7, kind: input, shape index: {}]
  %s8 = inlined_call_operand.vmem [shape: f32[1,8], index: 8, kind: input, shape index: {}]
  %s9 = inlined_call_operand.hbm [shape: f32[8,8], index: 9, kind: output, shape index: {}]
  %s10 = sld [smem:[#allocation0]]
  $region46: #{tpu_custom_call.1} parent=0
    _
  %s12 = ssub.s32 1, %s10
  %s13 = scalar_select 0, %s12, %s10
  $region1: #{tpu_custom_call.1} parent=0
    #allocation2 [shape = 'u8[4096]{0}', space=vmem, size = 0x1000, scoped, tag = 'output window, operand 0, single buffered']
    #allocation3 [shape = 's32[1]{0}', space=sflag, size = 0x4, scoped, tag = 'scoped memory for tpu_custom_call.1']
    %14 = vsyncpa [#allocation3], 0
    // Predicated region
    $region2: #{tpu_custom_call.1} parent=1 // pred_check
      _
    $region3: #{tpu_custom_call.1} parent=1 // pred_check_branch
      %16 = sbr.rel (0) target = $region5
    $region4: #{tpu_custom_call.1} parent=1 // pred_region
      _
    $region5: #{tpu_custom_call.1} parent=1 // pred_fallthru
      _
    // Predicated region
    $region6: #{tpu_custom_call.1} parent=1 // pred_check
      _
    $region7: #{tpu_custom_call.1} parent=1 // pred_check_branch
      %18 = sbr.rel (0) target = $region9
    $region8: #{tpu_custom_call.1} parent=1 // pred_region
      _
    $region9: #{tpu_custom_call.1} parent=1 // pred_fallthru
      _
    // Predicated region
    $region10: #{tpu_custom_call.1} parent=1 // pred_check
      _
    $region11: #{tpu_custom_call.1} parent=1 // pred_check_branch
      %20 = sbr.rel (0) target = $region13
    $region12: #{tpu_custom_call.1} parent=1 // pred_region
      _
    $region13: #{tpu_custom_call.1} parent=1 // pred_fallthru
      _
    // Predicated region
    $region14: #{tpu_custom_call.1} parent=1 // pred_check
      _
    $region15: #{tpu_custom_call.1} parent=1 // pred_check_branch
      %22 = sbr.rel (0) target = $region17
    $region16: #{tpu_custom_call.1} parent=1 // pred_region
      _
    $region17: #{tpu_custom_call.1} parent=1 // pred_fallthru
      _
    // Predicated region
    $region18: #{tpu_custom_call.1} parent=1 // pred_check
      _
    $region19: #{tpu_custom_call.1} parent=1 // pred_check_branch
      %24 = sbr.rel (0) target = $region21
    $region20: #{tpu_custom_call.1} parent=1 // pred_region
      _
    $region21: #{tpu_custom_call.1} parent=1 // pred_fallthru
      _
    // Predicated region
    $region22: #{tpu_custom_call.1} parent=1 // pred_check
      _
    $region23: #{tpu_custom_call.1} parent=1 // pred_check_branch
      %26 = sbr.rel (0) target = $region25
    $region24: #{tpu_custom_call.1} parent=1 // pred_region
      _
    $region25: #{tpu_custom_call.1} parent=1 // pred_fallthru
      _
    // Predicated region
    $region26: #{tpu_custom_call.1} parent=1 // pred_check
      _
    $region27: #{tpu_custom_call.1} parent=1 // pred_check_branch
      %28 = sbr.rel (0) target = $region29
    $region28: #{tpu_custom_call.1} parent=1 // pred_region
      _
    $region29: #{tpu_custom_call.1} parent=1 // pred_fallthru
      _
    // Predicated region
    $region30: #{tpu_custom_call.1} parent=1 // pred_check
      _
    $region31: #{tpu_custom_call.1} parent=1 // pred_check_branch
      %30 = sbr.rel (0) target = $region33
    $region32: #{tpu_custom_call.1} parent=1 // pred_region
      _
    $region33: #{tpu_custom_call.1} parent=1 // pred_fallthru
      _
    // Predicated region
    $region34: #{tpu_custom_call.1} parent=1 // pred_check
      _
    $region35: #{tpu_custom_call.1} parent=1 // pred_check_branch
      %32 = sbr.rel (0) target = $region37
    $region36: #{tpu_custom_call.1} parent=1 // pred_region
      _
    $region37: #{tpu_custom_call.1} parent=1 // pred_fallthru
      _
    %v33 = vld [vmem:[%s0] sm:$0xff]
    %v34 = vld [vmem:[%s0 + $0x8] sm:$0xff]
    %v35 = vld [vmem:[%s0 + $0x10] sm:$0xff]
    %v36 = vld [vmem:[%s0 + $0x18] sm:$0xff]
    %v37 = vld [vmem:[%s0 + $0x20] sm:$0xff]
    %v38 = vld [vmem:[%s0 + $0x28] sm:$0xff]
    %v39 = vld [vmem:[%s0 + $0x30] sm:$0xff]
    %v40 = vld [vmem:[%s0 + $0x38] sm:$0xff]
    %v41 = vld [vmem:[%s1] sm:$0xff]
    %v42 = vld [vmem:[%s1 + $0x8] sm:$0xff]
    %v43 = vld [vmem:[%s3] sm:$0x1]
    %v45 = vlaneseq
    %v46 = vshrl.u32 %v45, 7
    %v47 = vsub.s32 0, %v46
    %v48 = vrot.slane %v43, %v47
    %vm50 = vcmask 130048
    %v52 = vsel %vm50, %v33, 0
    %v55 = vsel %vm50, %v34, 0
    %v58 = vsel %vm50, %v35, 0
    %v61 = vsel %vm50, %v36, 0
    %v64 = vsel %vm50, %v37, 0
    %v67 = vsel %vm50, %v38, 0
    %v70 = vsel %vm50, %v39, 0
    %v73 = vsel %vm50, %v40, 0
    %75 = vmatprep.subr.mxu0 0.0
    %76 = vmatpush1.msra.mxu0 %v41
    %77 = vmatprep.subr.mxu0 0.0
    %78 = vmatpush1.msra.mxu0 %v42
    %79 = vmatprep.subr.mxu0 0.0
    %80 = vmatpush1.msra.mxu0 0.0
    %81 = vmatprep.subr.mxu0 0.0
    %82 = vmatpush1.msra.mxu0 0.0
    %83 = vmatprep.subr.mxu0 0.0
    %84 = vmatpush1.msra.mxu0 0.0
    %85 = vmatprep.subr.mxu0 0.0
    %86 = vmatpush1.msra.mxu0 0.0
    %87 = vmatprep.subr.mxu0 0.0
    %88 = vmatpush1.msra.mxu0 0.0
    %89 = vmatprep.subr.mxu0 0.0
    %90 = vmatpush1.msra.mxu0 0.0
    %91 = vmatprep.subr.mxu0 0.0
    %92 = vmatpush1.msra.mxu0 0.0
    %93 = vmatprep.subr.mxu0 0.0
    %94 = vmatpush1.msra.mxu0 0.0
    %95 = vmatprep.subr.mxu0 0.0
    %96 = vmatpush1.msra.mxu0 0.0
    %97 = vmatprep.subr.mxu0 0.0
    %98 = vmatpush1.msra.mxu0 0.0
    %99 = vmatprep.subr.mxu0 0.0
    %100 = vmatpush1.msra.mxu0 0.0
    %101 = vmatprep.subr.mxu0 0.0
    %102 = vmatpush1.msra.mxu0 0.0
    %103 = vmatprep.subr.mxu0 0.0
    %104 = vmatpush1.msra.mxu0 0.0
    %105 = vmatprep.subr.mxu0 0.0
    %106 = vmatpush1.msra.mxu0 0.0
    %107 = vmatprep.subr.mxu0 0.0
    %108 = vmatpush1.msra.mxu0 0.0
    %109 = vmatprep.subr.mxu0 0.0
    %110 = vmatpush1.msra.mxu0 0.0
    %111 = vmatprep.subr.mxu0 0.0
    %112 = vmatpush1.msra.mxu0 0.0
    %113 = vmatprep.subr.mxu0 0.0
    %114 = vmatpush1.msra.mxu0 0.0
    %115 = vmatprep.subr.mxu0 0.0
    %116 = vmatpush1.msra.mxu0 0.0
    %117 = vmatprep.subr.mxu0 0.0
    %118 = vmatpush1.msra.mxu0 0.0
    %119 = vmatprep.subr.mxu0 0.0
    %120 = vmatpush1.msra.mxu0 0.0
    %121 = vmatprep.subr.mxu0 0.0
    %122 = vmatpush1.msra.mxu0 0.0
    %123 = vmatprep.subr.mxu0 0.0
    %124 = vmatpush1.msra.mxu0 0.0
    %125 = vmatprep.subr.mxu0 0.0
    %126 = vmatpush1.msra.mxu0 0.0
    %127 = vmatprep.subr.mxu0 0.0
    %128 = vmatpush1.msra.mxu0 0.0
    %129 = vmatprep.subr.mxu0 0.0
    %130 = vmatpush1.msra.mxu0 0.0
    %131 = vmatprep.subr.mxu0 0.0
    %132 = vmatpush1.msra.mxu0 0.0
    %133 = vmatprep.subr.mxu0 0.0
    %134 = vmatpush1.msra.mxu0 0.0
    %135 = vmatprep.subr.mxu0 0.0
    %136 = vmatpush1.msra.mxu0 0.0
    %137 = vmatprep.subr.mxu0 0.0
    %138 = vmatpush1.msra.mxu0 0.0
    %139 = vmatprep.mubr.f32.mxu0 0.0
    %140 = vmatmul.mubr.f32.gmra.mrb[0].mxu0 %v52
    %v141 = vpop.f32.mrb[0].mxu0
    %v142 = vadd.f32 %v48, %v141
    %v143 = vpop.f32.mrb[0].mxu0
    %144 = vmatprep.mubr.f32.mxu0 0.0
    %145 = vmatmul.mubr.f32.gmra.mrb[0].mxu0 %v55
    %v146 = vpop.f32.mrb[0].mxu0
    %v147 = vadd.f32 %v48, %v146
    %v148 = vpop.f32.mrb[0].mxu0
    %149 = vmatprep.mubr.f32.mxu0 0.0
    %150 = vmatmul.mubr.f32.gmra.mrb[0].mxu0 %v58
    %v151 = vpop.f32.mrb[0].mxu0
    %v152 = vadd.f32 %v48, %v151
    %v153 = vpop.f32.mrb[0].mxu0
    %154 = vmatprep.mubr.f32.mxu0 0.0
    %155 = vmatmul.mubr.f32.gmra.mrb[0].mxu0 %v61
    %v156 = vpop.f32.mrb[0].mxu0
    %v157 = vadd.f32 %v48, %v156
    %v158 = vpop.f32.mrb[0].mxu0
    %159 = vmatprep.mubr.f32.mxu0 0.0
    %160 = vmatmul.mubr.f32.gmra.mrb[0].mxu0 %v64
    %v161 = vpop.f32.mrb[0].mxu0
    %v162 = vadd.f32 %v48, %v161
    %v163 = vpop.f32.mrb[0].mxu0
    %164 = vmatprep.mubr.f32.mxu0 0.0
    %165 = vmatmul.mubr.f32.gmra.mrb[0].mxu0 %v67
    %v166 = vpop.f32.mrb[0].mxu0
    %v167 = vadd.f32 %v48, %v166
    %v168 = vpop.f32.mrb[0].mxu0
    %169 = vmatprep.mubr.f32.mxu0 0.0
    %170 = vmatmul.mubr.f32.gmra.mrb[0].mxu0 %v70
    %v171 = vpop.f32.mrb[0].mxu0
    %v172 = vadd.f32 %v48, %v171
    %v173 = vpop.f32.mrb[0].mxu0
    %174 = vmatprep.mubr.f32.mxu0 0.0
    %175 = vmatmul.mubr.f32.gmra.mrb[0].mxu0 %v73
    %v176 = vpop.f32.mrb[0].mxu0
    %v177 = vadd.f32 %v48, %v176
    %v178 = vpop.f32.mrb[0].mxu0
    %179 = vdwg.mxu0
    %v180 = vlaneseq
    %v181 = vand.u32 %v180, 127
    %vm182 = vcmp.ge.s32.totalorder %v181, 64
    %vm183 = vcmp.lt.s32.totalorder %v181, 96
    %vm184 = vmand %vm182, %vm183
    %v185 = vsel %vm184, 1.0, 0.5
    %v186 = vsel %vm184, 0.0, 0.5
    %v187 = vld [vmem:[%s6] sm:$0x1]
    %v189 = vlaneseq
    %v190 = vshrl.u32 %v189, 7
    %v191 = vsub.s32 0, %v190
    %v192 = vrot.slane %v187, %v191
    %v194 = vld [vmem:[%s2] sm:$0xff]
    %v195 = vld [vmem:[%s2 + $0x8] sm:$0xff]
    %v196 = vld [vmem:[%s2 + $0x10] sm:$0xff]
    %v197 = vld [vmem:[%s2 + $0x18] sm:$0xff]
    %vm198 = vcmask 261120
    %v200 = vsel %vm198, 0.0, 0
    %202 = vmatprep.subr.mxu0 0.0
    %203 = vmatpush1.msra.mxu0 %v194
    %204 = vmatprep.subr.mxu0 0.0
    %205 = vmatpush1.msra.mxu0 %v195
    %206 = vmatprep.subr.mxu0 0.0
    %207 = vmatpush1.msra.mxu0 %v196
    %208 = vmatprep.subr.mxu0 0.0
    %209 = vmatpush1.msra.mxu0 %v197
    %210 = vmatprep.subr.mxu0 0.0
    %211 = vmatpush1.msra.mxu0 0.0
    %212 = vmatprep.subr.mxu0 0.0
    %213 = vmatpush1.msra.mxu0 0.0
    %214 = vmatprep.subr.mxu0 0.0
    %215 = vmatpush1.msra.mxu0 0.0
    %216 = vmatprep.subr.mxu0 0.0
    %217 = vmatpush1.msra.mxu0 0.0
    %218 = vmatprep.subr.mxu0 0.0
    %219 = vmatpush1.msra.mxu0 0.0
    %220 = vmatprep.subr.mxu0 0.0
    %221 = vmatpush1.msra.mxu0 0.0
    %222 = vmatprep.subr.mxu0 0.0
    %223 = vmatpush1.msra.mxu0 0.0
    %224 = vmatprep.subr.mxu0 0.0
    %225 = vmatpush1.msra.mxu0 0.0
    %226 = vmatprep.subr.mxu0 0.0
    %227 = vmatpush1.msra.mxu0 0.0
    %228 = vmatprep.subr.mxu0 0.0
    %229 = vmatpush1.msra.mxu0 0.0
    %230 = vmatprep.subr.mxu0 0.0
    %231 = vmatpush1.msra.mxu0 0.0
    %232 = vmatprep.subr.mxu0 0.0
    %233 = vmatpush1.msra.mxu0 0.0
    %234 = vmatprep.subr.mxu0 0.0
    %235 = vmatpush1.msra.mxu0 0.0
    %236 = vmatprep.subr.mxu0 0.0
    %237 = vmatpush1.msra.mxu0 0.0
    %238 = vmatprep.subr.mxu0 0.0
    %239 = vmatpush1.msra.mxu0 0.0
    %240 = vmatprep.subr.mxu0 0.0
    %241 = vmatpush1.msra.mxu0 0.0
    %242 = vmatprep.subr.mxu0 0.0
    %243 = vmatpush1.msra.mxu0 0.0
    %244 = vmatprep.subr.mxu0 0.0
    %245 = vmatpush1.msra.mxu0 0.0
    %246 = vmatprep.subr.mxu0 0.0
    %247 = vmatpush1.msra.mxu0 0.0
    %248 = vmatprep.subr.mxu0 0.0
    %249 = vmatpush1.msra.mxu0 0.0
    %250 = vmatprep.subr.mxu0 0.0
    %251 = vmatpush1.msra.mxu0 0.0
    %252 = vmatprep.subr.mxu0 0.0
    %253 = vmatpush1.msra.mxu0 0.0
    %254 = vmatprep.subr.mxu0 0.0
    %255 = vmatpush1.msra.mxu0 0.0
    %256 = vmatprep.subr.mxu0 0.0
    %257 = vmatpush1.msra.mxu0 0.0
    %258 = vmatprep.subr.mxu0 0.0
    %259 = vmatpush1.msra.mxu0 0.0
    %260 = vmatprep.subr.mxu0 0.0
    %261 = vmatpush1.msra.mxu0 0.0
    %262 = vmatprep.subr.mxu0 0.0
    %263 = vmatpush1.msra.mxu0 0.0
    %264 = vmatprep.subr.mxu0 0.0
    %265 = vmatpush1.msra.mxu0 0.0
    %266 = vmatprep.mubr.f32.mxu0 0.0
    %267 = vmatmul.mubr.f32.gmra.mrb[0].mxu0 %v200
    %v268 = vpop.f32.mrb[0].mxu0
    %v269 = vadd.f32 0.0, %v268
    %v270 = vpop.f32.mrb[0].mxu0
    %271 = vdwg.mxu0
    %v272 = vld [vmem:[%s5] sm:$0xff]
    %v273 = vld [vmem:[%s5 + $0x8] sm:$0xff]
    %v274 = vld [vmem:[%s5 + $0x10] sm:$0xff]
    %v275 = vld [vmem:[%s5 + $0x18] sm:$0xff]
    %276 = vmatprep.subr.mxu0 0.0
    %277 = vmatpush1.msra.mxu0 %v272
    %278 = vmatprep.subr.mxu0 0.0
    %279 = vmatpush1.msra.mxu0 %v273
    %280 = vmatprep.subr.mxu0 0.0
    %281 = vmatpush1.msra.mxu0 %v274
    %282 = vmatprep.subr.mxu0 0.0
    %283 = vmatpush1.msra.mxu0 %v275
    %284 = vmatprep.subr.mxu0 0.0
    %285 = vmatpush1.msra.mxu0 0.0
    %286 = vmatprep.subr.mxu0 0.0
    %287 = vmatpush1.msra.mxu0 0.0
    %288 = vmatprep.subr.mxu0 0.0
    %289 = vmatpush1.msra.mxu0 0.0
    %290 = vmatprep.subr.mxu0 0.0
    %291 = vmatpush1.msra.mxu0 0.0
    %292 = vmatprep.subr.mxu0 0.0
    %293 = vmatpush1.msra.mxu0 0.0
    %294 = vmatprep.subr.mxu0 0.0
    %295 = vmatpush1.msra.mxu0 0.0
    %296 = vmatprep.subr.mxu0 0.0
    %297 = vmatpush1.msra.mxu0 0.0
    %298 = vmatprep.subr.mxu0 0.0
    %299 = vmatpush1.msra.mxu0 0.0
    %300 = vmatprep.subr.mxu0 0.0
    %301 = vmatpush1.msra.mxu0 0.0
    %302 = vmatprep.subr.mxu0 0.0
    %303 = vmatpush1.msra.mxu0 0.0
    %304 = vmatprep.subr.mxu0 0.0
    %305 = vmatpush1.msra.mxu0 0.0
    %306 = vmatprep.subr.mxu0 0.0
    %307 = vmatpush1.msra.mxu0 0.0
    %308 = vmatprep.subr.mxu0 0.0
    %309 = vmatpush1.msra.mxu0 0.0
    %310 = vmatprep.subr.mxu0 0.0
    %311 = vmatpush1.msra.mxu0 0.0
    %312 = vmatprep.subr.mxu0 0.0
    %313 = vmatpush1.msra.mxu0 0.0
    %314 = vmatprep.subr.mxu0 0.0
    %315 = vmatpush1.msra.mxu0 0.0
    %316 = vmatprep.subr.mxu0 0.0
    %317 = vmatpush1.msra.mxu0 0.0
    %318 = vmatprep.subr.mxu0 0.0
    %319 = vmatpush1.msra.mxu0 0.0
    %320 = vmatprep.subr.mxu0 0.0
    %321 = vmatpush1.msra.mxu0 0.0
    %322 = vmatprep.subr.mxu0 0.0
    %323 = vmatpush1.msra.mxu0 0.0
    %324 = vmatprep.subr.mxu0 0.0
    %325 = vmatpush1.msra.mxu0 0.0
    %326 = vmatprep.subr.mxu0 0.0
    %327 = vmatpush1.msra.mxu0 0.0
    %328 = vmatprep.subr.mxu0 0.0
    %329 = vmatpush1.msra.mxu0 0.0
    %330 = vmatprep.subr.mxu0 0.0
    %331 = vmatpush1.msra.mxu0 0.0
    %332 = vmatprep.subr.mxu0 0.0
    %333 = vmatpush1.msra.mxu0 0.0
    %334 = vmatprep.subr.mxu0 0.0
    %335 = vmatpush1.msra.mxu0 0.0
    %336 = vmatprep.subr.mxu0 0.0
    %337 = vmatpush1.msra.mxu0 0.0
    %338 = vmatprep.subr.mxu0 0.0
    %339 = vmatpush1.msra.mxu0 0.0
    %340 = vmatprep.mubr.f32.mxu0 0.0
    %341 = vmatmul.mubr.f32.gmra.mrb[0].mxu0 %v200
    %v342 = vpop.f32.mrb[0].mxu0
    %v343 = vadd.f32 %v192, %v342
    %v344 = vpop.f32.mrb[0].mxu0
    %345 = vdwg.mxu0
    %v346 = vadd.f32 %v142, %v269
    %v347 = vmul.f32 %v346, %v185
    %v348 = vtanh.pop %v347
    %v349 = vmul.f32 %v348, %v185
    %v350 = vadd.f32 %v349, %v186
    %v351 = vmul.f32 %v350, 0.0
    %353 = vrot.lane.b32.xlu0 %v350, 64
    %v354 = vpop.permute.xlu0 %353
    %v356 = vmul.f32 %v350, %v354
    %358 = vrot.lane.b32.xlu0 %v356, 32
    %v359 = vpop.permute.xlu0 %358
    %v361 = vadd.f32 %v351, %v359
    %v362 = vtanh.pop %v361
    %364 = vrot.lane.b32.xlu0 %v362, 64
    %v365 = vpop.permute.xlu0 %364
    %v367 = vmul.f32 %v350, %v365
    %v368 = vld [vmem:[%s4] sm:$0xff]
    %v369 = vld [vmem:[%s4 + $0x8] sm:$0xff]
    %v370 = vld [vmem:[%s4 + $0x10] sm:$0xff]
    %v371 = vld [vmem:[%s4 + $0x18] sm:$0xff]
    %373 = vrot.lane.b32.xlu0 %v367, 32
    %v374 = vpop.permute.xlu0 %373
    %v375 = vsel %vm198, %v374, 0
    %377 = vmatprep.subr.mxu0 0.0
    %378 = vmatpush1.msra.mxu0 %v368
    %379 = vmatprep.subr.mxu0 0.0
    %380 = vmatpush1.msra.mxu0 %v369
    %381 = vmatprep.subr.mxu0 0.0
    %382 = vmatpush1.msra.mxu0 %v370
    %383 = vmatprep.subr.mxu0 0.0
    %384 = vmatpush1.msra.mxu0 %v371
    %385 = vmatprep.subr.mxu0 0.0
    %386 = vmatpush1.msra.mxu0 0.0
    %387 = vmatprep.subr.mxu0 0.0
    %388 = vmatpush1.msra.mxu0 0.0
    %389 = vmatprep.subr.mxu0 0.0
    %390 = vmatpush1.msra.mxu0 0.0
    %391 = vmatprep.subr.mxu0 0.0
    %392 = vmatpush1.msra.mxu0 0.0
    %393 = vmatprep.subr.mxu0 0.0
    %394 = vmatpush1.msra.mxu0 0.0
    %395 = vmatprep.subr.mxu0 0.0
    %396 = vmatpush1.msra.mxu0 0.0
    %397 = vmatprep.subr.mxu0 0.0
    %398 = vmatpush1.msra.mxu0 0.0
    %399 = vmatprep.subr.mxu0 0.0
    %400 = vmatpush1.msra.mxu0 0.0
    %401 = vmatprep.subr.mxu0 0.0
    %402 = vmatpush1.msra.mxu0 0.0
    %403 = vmatprep.subr.mxu0 0.0
    %404 = vmatpush1.msra.mxu0 0.0
    %405 = vmatprep.subr.mxu0 0.0
    %406 = vmatpush1.msra.mxu0 0.0
    %407 = vmatprep.subr.mxu0 0.0
    %408 = vmatpush1.msra.mxu0 0.0
    %409 = vmatprep.subr.mxu0 0.0
    %410 = vmatpush1.msra.mxu0 0.0
    %411 = vmatprep.subr.mxu0 0.0
    %412 = vmatpush1.msra.mxu0 0.0
    %413 = vmatprep.subr.mxu0 0.0
    %414 = vmatpush1.msra.mxu0 0.0
    %415 = vmatprep.subr.mxu0 0.0
    %416 = vmatpush1.msra.mxu0 0.0
    %417 = vmatprep.subr.mxu0 0.0
    %418 = vmatpush1.msra.mxu0 0.0
    %419 = vmatprep.subr.mxu0 0.0
    %420 = vmatpush1.msra.mxu0 0.0
    %421 = vmatprep.subr.mxu0 0.0
    %422 = vmatpush1.msra.mxu0 0.0
    %423 = vmatprep.subr.mxu0 0.0
    %424 = vmatpush1.msra.mxu0 0.0
    %425 = vmatprep.subr.mxu0 0.0
    %426 = vmatpush1.msra.mxu0 0.0
    %427 = vmatprep.subr.mxu0 0.0
    %428 = vmatpush1.msra.mxu0 0.0
    %429 = vmatprep.subr.mxu0 0.0
    %430 = vmatpush1.msra.mxu0 0.0
    %431 = vmatprep.subr.mxu0 0.0
    %432 = vmatpush1.msra.mxu0 0.0
    %433 = vmatprep.subr.mxu0 0.0
    %434 = vmatpush1.msra.mxu0 0.0
    %435 = vmatprep.subr.mxu0 0.0
    %436 = vmatpush1.msra.mxu0 0.0
    %437 = vmatprep.subr.mxu0 0.0
    %438 = vmatpush1.msra.mxu0 0.0
    %439 = vmatprep.subr.mxu0 0.0
    %440 = vmatpush1.msra.mxu0 0.0
    %441 = vmatprep.mubr.f32.mxu0 0.0
    %442 = vmatmul.mubr.f32.gmra.mrb[0].mxu0 %v375
    %v443 = vpop.f32.mrb[0].mxu0
    %v444 = vadd.f32 %v343, %v443
    %v445 = vpop.f32.mrb[0].mxu0
    %446 = vdwg.mxu0
    %v447 = vmul.f32 %v444, %v185
    %v448 = vtanh.pop %v447
    %v449 = vmul.f32 %v448, %v185
    %v450 = vadd.f32 %v449, %v186
    %v451 = vmul.f32 %v450, 0.0
    %453 = vrot.lane.b32.xlu0 %v450, 64
    %v454 = vpop.permute.xlu0 %453
    %v456 = vmul.f32 %v450, %v454
    %458 = vrot.lane.b32.xlu0 %v456, 32
    %v459 = vpop.permute.xlu0 %458
    %v461 = vadd.f32 %v451, %v459
    %v462 = vtanh.pop %v461
    %464 = vrot.lane.b32.xlu0 %v462, 64
    %v465 = vpop.permute.xlu0 %464
    %v467 = vmul.f32 %v450, %v465
    %468 = vmatprep.subr.mxu0 0.0
    %469 = vmatpush1.msra.mxu0 %v194
    %470 = vmatprep.subr.mxu0 0.0
    %471 = vmatpush1.msra.mxu0 %v195
    %472 = vmatprep.subr.mxu0 0.0
    %473 = vmatpush1.msra.mxu0 %v196
    %474 = vmatprep.subr.mxu0 0.0
    %475 = vmatpush1.msra.mxu0 %v197
    %476 = vmatprep.subr.mxu0 0.0
    %477 = vmatpush1.msra.mxu0 0.0
    %478 = vmatprep.subr.mxu0 0.0
    %479 = vmatpush1.msra.mxu0 0.0
    %480 = vmatprep.subr.mxu0 0.0
    %481 = vmatpush1.msra.mxu0 0.0
    %482 = vmatprep.subr.mxu0 0.0
    %483 = vmatpush1.msra.mxu0 0.0
    %484 = vmatprep.subr.mxu0 0.0
    %485 = vmatpush1.msra.mxu0 0.0
    %486 = vmatprep.subr.mxu0 0.0
    %487 = vmatpush1.msra.mxu0 0.0
    %488 = vmatprep.subr.mxu0 0.0
    %489 = vmatpush1.msra.mxu0 0.0
    %490 = vmatprep.subr.mxu0 0.0
    %491 = vmatpush1.msra.mxu0 0.0
    %492 = vmatprep.subr.mxu0 0.0
    %493 = vmatpush1.msra.mxu0 0.0
    %494 = vmatprep.subr.mxu0 0.0
    %495 = vmatpush1.msra.mxu0 0.0
    %496 = vmatprep.subr.mxu0 0.0
    %497 = vmatpush1.msra.mxu0 0.0
    %498 = vmatprep.subr.mxu0 0.0
    %499 = vmatpush1.msra.mxu0 0.0
    %500 = vmatprep.subr.mxu0 0.0
    %501 = vmatpush1.msra.mxu0 0.0
    %502 = vmatprep.subr.mxu0 0.0
    %503 = vmatpush1.msra.mxu0 0.0
    %504 = vmatprep.subr.mxu0 0.0
    %505 = vmatpush1.msra.mxu0 0.0
    %506 = vmatprep.subr.mxu0 0.0
    %507 = vmatpush1.msra.mxu0 0.0
    %508 = vmatprep.subr.mxu0 0.0
    %509 = vmatpush1.msra.mxu0 0.0
    %510 = vmatprep.subr.mxu0 0.0
    %511 = vmatpush1.msra.mxu0 0.0
    %512 = vmatprep.subr.mxu0 0.0
    %513 = vmatpush1.msra.mxu0 0.0
    %514 = vmatprep.subr.mxu0 0.0
    %515 = vmatpush1.msra.mxu0 0.0
    %516 = vmatprep.subr.mxu0 0.0
    %517 = vmatpush1.msra.mxu0 0.0
    %518 = vmatprep.subr.mxu0 0.0
    %519 = vmatpush1.msra.mxu0 0.0
    %520 = vmatprep.subr.mxu0 0.0
    %521 = vmatpush1.msra.mxu0 0.0
    %522 = vmatprep.subr.mxu0 0.0
    %523 = vmatpush1.msra.mxu0 0.0
    %524 = vmatprep.subr.mxu0 0.0
    %525 = vmatpush1.msra.mxu0 0.0
    %526 = vmatprep.subr.mxu0 0.0
    %527 = vmatpush1.msra.mxu0 0.0
    %528 = vmatprep.subr.mxu0 0.0
    %529 = vmatpush1.msra.mxu0 0.0
    %530 = vmatprep.subr.mxu0 0.0
    %531 = vmatpush1.msra.mxu0 0.0
    %532 = vmatprep.mubr.f32.mxu0 0.0
    %533 = vmatmul.mubr.f32.gmra.mrb[0].mxu0 %v375
    %v534 = vpop.f32.mrb[0].mxu0
    %v535 = vadd.f32 0.0, %v534
    %v536 = vpop.f32.mrb[0].mxu0
    %537 = vdwg.mxu0
    %539 = vrot.lane.b32.xlu0 %v467, 32
    %v540 = vpop.permute.xlu0 %539
    %v541 = vsel %vm198, %v540, 0
    %543 = vmatprep.subr.mxu0 0.0
    %544 = vmatpush1.msra.mxu0 %v272
    %545 = vmatprep.subr.mxu0 0.0
    %546 = vmatpush1.msra.mxu0 %v273
    %547 = vmatprep.subr.mxu0 0.0
    %548 = vmatpush1.msra.mxu0 %v274
    %549 = vmatprep.subr.mxu0 0.0
    %550 = vmatpush1.msra.mxu0 %v275
    %551 = vmatprep.subr.mxu0 0.0
    %552 = vmatpush1.msra.mxu0 0.0
    %553 = vmatprep.subr.mxu0 0.0
    %554 = vmatpush1.msra.mxu0 0.0
    %555 = vmatprep.subr.mxu0 0.0
    %556 = vmatpush1.msra.mxu0 0.0
    %557 = vmatprep.subr.mxu0 0.0
    %558 = vmatpush1.msra.mxu0 0.0
    %559 = vmatprep.subr.mxu0 0.0
    %560 = vmatpush1.msra.mxu0 0.0
    %561 = vmatprep.subr.mxu0 0.0
    %562 = vmatpush1.msra.mxu0 0.0
    %563 = vmatprep.subr.mxu0 0.0
    %564 = vmatpush1.msra.mxu0 0.0
    %565 = vmatprep.subr.mxu0 0.0
    %566 = vmatpush1.msra.mxu0 0.0
    %567 = vmatprep.subr.mxu0 0.0
    %568 = vmatpush1.msra.mxu0 0.0
    %569 = vmatprep.subr.mxu0 0.0
    %570 = vmatpush1.msra.mxu0 0.0
    %571 = vmatprep.subr.mxu0 0.0
    %572 = vmatpush1.msra.mxu0 0.0
    %573 = vmatprep.subr.mxu0 0.0
    %574 = vmatpush1.msra.mxu0 0.0
    %575 = vmatprep.subr.mxu0 0.0
    %576 = vmatpush1.msra.mxu0 0.0
    %577 = vmatprep.subr.mxu0 0.0
    %578 = vmatpush1.msra.mxu0 0.0
    %579 = vmatprep.subr.mxu0 0.0
    %580 = vmatpush1.msra.mxu0 0.0
    %581 = vmatprep.subr.mxu0 0.0
    %582 = vmatpush1.msra.mxu0 0.0
    %583 = vmatprep.subr.mxu0 0.0
    %584 = vmatpush1.msra.mxu0 0.0
    %585 = vmatprep.subr.mxu0 0.0
    %586 = vmatpush1.msra.mxu0 0.0
    %587 = vmatprep.subr.mxu0 0.0
    %588 = vmatpush1.msra.mxu0 0.0
    %589 = vmatprep.subr.mxu0 0.0
    %590 = vmatpush1.msra.mxu0 0.0
    %591 = vmatprep.subr.mxu0 0.0
    %592 = vmatpush1.msra.mxu0 0.0
    %593 = vmatprep.subr.mxu0 0.0
    %594 = vmatpush1.msra.mxu0 0.0
    %595 = vmatprep.subr.mxu0 0.0
    %596 = vmatpush1.msra.mxu0 0.0
    %597 = vmatprep.subr.mxu0 0.0
    %598 = vmatpush1.msra.mxu0 0.0
    %599 = vmatprep.subr.mxu0 0.0
    %600 = vmatpush1.msra.mxu0 0.0
    %601 = vmatprep.subr.mxu0 0.0
    %602 = vmatpush1.msra.mxu0 0.0
    %603 = vmatprep.subr.mxu0 0.0
    %604 = vmatpush1.msra.mxu0 0.0
    %605 = vmatprep.subr.mxu0 0.0
    %606 = vmatpush1.msra.mxu0 0.0
    %607 = vmatprep.mubr.f32.mxu0 0.0
    %608 = vmatmul.mubr.f32.gmra.mrb[0].mxu0 %v541
    %v609 = vpop.f32.mrb[0].mxu0
    %v610 = vadd.f32 %v192, %v609
    %v611 = vpop.f32.mrb[0].mxu0
    %612 = vdwg.mxu0
    %v613 = vadd.f32 %v147, %v535
    %v614 = vmul.f32 %v613, %v185
    %v615 = vtanh.pop %v614
    %v616 = vmul.f32 %v615, %v185
    %v617 = vadd.f32 %v616, %v186
    %v618 = vmul.f32 %v617, %v361
    %620 = vrot.lane.b32.xlu0 %v617, 64
    %v621 = vpop.permute.xlu0 %620
    %v623 = vmul.f32 %v617, %v621
    %625 = vrot.lane.b32.xlu0 %v623, 32
    %v626 = vpop.permute.xlu0 %625
    %v628 = vadd.f32 %v618, %v626
    %v629 = vtanh.pop %v628
    %631 = vrot.lane.b32.xlu0 %v629, 64
    %v632 = vpop.permute.xlu0 %631
    %v634 = vmul.f32 %v617, %v632
    %636 = vrot.lane.b32.xlu0 %v634, 32
    %v637 = vpop.permute.xlu0 %636
    %v638 = vsel %vm198, %v637, 0
    %640 = vmatprep.subr.mxu0 0.0
    %641 = vmatpush1.msra.mxu0 %v368
    %642 = vmatprep.subr.mxu0 0.0
    %643 = vmatpush1.msra.mxu0 %v369
    %644 = vmatprep.subr.mxu0 0.0
    %645 = vmatpush1.msra.mxu0 %v370
    %646 = vmatprep.subr.mxu0 0.0
    %647 = vmatpush1.msra.mxu0 %v371
    %648 = vmatprep.subr.mxu0 0.0
    %649 = vmatpush1.msra.mxu0 0.0
    %650 = vmatprep.subr.mxu0 0.0
    %651 = vmatpush1.msra.mxu0 0.0
    %652 = vmatprep.subr.mxu0 0.0
    %653 = vmatpush1.msra.mxu0 0.0
    %654 = vmatprep.subr.mxu0 0.0
    %655 = vmatpush1.msra.mxu0 0.0
    %656 = vmatprep.subr.mxu0 0.0
    %657 = vmatpush1.msra.mxu0 0.0
    %658 = vmatprep.subr.mxu0 0.0
    %659 = vmatpush1.msra.mxu0 0.0
    %660 = vmatprep.subr.mxu0 0.0
    %661 = vmatpush1.msra.mxu0 0.0
    %662 = vmatprep.subr.mxu0 0.0
    %663 = vmatpush1.msra.mxu0 0.0
    %664 = vmatprep.subr.mxu0 0.0
    %665 = vmatpush1.msra.mxu0 0.0
    %666 = vmatprep.subr.mxu0 0.0
    %667 = vmatpush1.msra.mxu0 0.0
    %668 = vmatprep.subr.mxu0 0.0
    %669 = vmatpush1.msra.mxu0 0.0
    %670 = vmatprep.subr.mxu0 0.0
    %671 = vmatpush1.msra.mxu0 0.0
    %672 = vmatprep.subr.mxu0 0.0
    %673 = vmatpush1.msra.mxu0 0.0
    %674 = vmatprep.subr.mxu0 0.0
    %675 = vmatpush1.msra.mxu0 0.0
    %676 = vmatprep.subr.mxu0 0.0
    %677 = vmatpush1.msra.mxu0 0.0
    %678 = vmatprep.subr.mxu0 0.0
    %679 = vmatpush1.msra.mxu0 0.0
    %680 = vmatprep.subr.mxu0 0.0
    %681 = vmatpush1.msra.mxu0 0.0
    %682 = vmatprep.subr.mxu0 0.0
    %683 = vmatpush1.msra.mxu0 0.0
    %684 = vmatprep.subr.mxu0 0.0
    %685 = vmatpush1.msra.mxu0 0.0
    %686 = vmatprep.subr.mxu0 0.0
    %687 = vmatpush1.msra.mxu0 0.0
    %688 = vmatprep.subr.mxu0 0.0
    %689 = vmatpush1.msra.mxu0 0.0
    %690 = vmatprep.subr.mxu0 0.0
    %691 = vmatpush1.msra.mxu0 0.0
    %692 = vmatprep.subr.mxu0 0.0
    %693 = vmatpush1.msra.mxu0 0.0
    %694 = vmatprep.subr.mxu0 0.0
    %695 = vmatpush1.msra.mxu0 0.0
    %696 = vmatprep.subr.mxu0 0.0
    %697 = vmatpush1.msra.mxu0 0.0
    %698 = vmatprep.subr.mxu0 0.0
    %699 = vmatpush1.msra.mxu0 0.0
    %700 = vmatprep.subr.mxu0 0.0
    %701 = vmatpush1.msra.mxu0 0.0
    %702 = vmatprep.subr.mxu0 0.0
    %703 = vmatpush1.msra.mxu0 0.0
    %704 = vmatprep.mubr.f32.mxu0 0.0
    %705 = vmatmul.mubr.f32.gmra.mrb[0].mxu0 %v638
    %v706 = vpop.f32.mrb[0].mxu0
    %v707 = vadd.f32 %v610, %v706
    %v708 = vpop.f32.mrb[0].mxu0
    %709 = vdwg.mxu0
    %v710 = vmul.f32 %v707, %v185
    %v711 = vtanh.pop %v710
    %v712 = vmul.f32 %v711, %v185
    %v713 = vadd.f32 %v712, %v186
    %v714 = vmul.f32 %v713, %v461
    %716 = vrot.lane.b32.xlu0 %v713, 64
    %v717 = vpop.permute.xlu0 %716
    %v719 = vmul.f32 %v713, %v717
    %721 = vrot.lane.b32.xlu0 %v719, 32
    %v722 = vpop.permute.xlu0 %721
    %v724 = vadd.f32 %v714, %v722
    %v725 = vtanh.pop %v724
    %727 = vrot.lane.b32.xlu0 %v725, 64
    %v728 = vpop.permute.xlu0 %727
    %v730 = vmul.f32 %v713, %v728
    %731 = vmatprep.subr.mxu0 0.0
    %732 = vmatpush1.msra.mxu0 %v194
    %733 = vmatprep.subr.mxu0 0.0
    %734 = vmatpush1.msra.mxu0 %v195
    %735 = vmatprep.subr.mxu0 0.0
    %736 = vmatpush1.msra.mxu0 %v196
    %737 = vmatprep.subr.mxu0 0.0
    %738 = vmatpush1.msra.mxu0 %v197
    %739 = vmatprep.subr.mxu0 0.0
    %740 = vmatpush1.msra.mxu0 0.0
    %741 = vmatprep.subr.mxu0 0.0
    %742 = vmatpush1.msra.mxu0 0.0
    %743 = vmatprep.subr.mxu0 0.0
    %744 = vmatpush1.msra.mxu0 0.0
    %745 = vmatprep.subr.mxu0 0.0
    %746 = vmatpush1.msra.mxu0 0.0
    %747 = vmatprep.subr.mxu0 0.0
    %748 = vmatpush1.msra.mxu0 0.0
    %749 = vmatprep.subr.mxu0 0.0
    %750 = vmatpush1.msra.mxu0 0.0
    %751 = vmatprep.subr.mxu0 0.0
    %752 = vmatpush1.msra.mxu0 0.0
    %753 = vmatprep.subr.mxu0 0.0
    %754 = vmatpush1.msra.mxu0 0.0
    %755 = vmatprep.subr.mxu0 0.0
    %756 = vmatpush1.msra.mxu0 0.0
    %757 = vmatprep.subr.mxu0 0.0
    %758 = vmatpush1.msra.mxu0 0.0
    %759 = vmatprep.subr.mxu0 0.0
    %760 = vmatpush1.msra.mxu0 0.0
    %761 = vmatprep.subr.mxu0 0.0
    %762 = vmatpush1.msra.mxu0 0.0
    %763 = vmatprep.subr.mxu0 0.0
    %764 = vmatpush1.msra.mxu0 0.0
    %765 = vmatprep.subr.mxu0 0.0
    %766 = vmatpush1.msra.mxu0 0.0
    %767 = vmatprep.subr.mxu0 0.0
    %768 = vmatpush1.msra.mxu0 0.0
    %769 = vmatprep.subr.mxu0 0.0
    %770 = vmatpush1.msra.mxu0 0.0
    %771 = vmatprep.subr.mxu0 0.0
    %772 = vmatpush1.msra.mxu0 0.0
    %773 = vmatprep.subr.mxu0 0.0
    %774 = vmatpush1.msra.mxu0 0.0
    %775 = vmatprep.subr.mxu0 0.0
    %776 = vmatpush1.msra.mxu0 0.0
    %777 = vmatprep.subr.mxu0 0.0
    %778 = vmatpush1.msra.mxu0 0.0
    %779 = vmatprep.subr.mxu0 0.0
    %780 = vmatpush1.msra.mxu0 0.0
    %781 = vmatprep.subr.mxu0 0.0
    %782 = vmatpush1.msra.mxu0 0.0
    %783 = vmatprep.subr.mxu0 0.0
    %784 = vmatpush1.msra.mxu0 0.0
    %785 = vmatprep.subr.mxu0 0.0
    %786 = vmatpush1.msra.mxu0 0.0
    %787 = vmatprep.subr.mxu0 0.0
    %788 = vmatpush1.msra.mxu0 0.0
    %789 = vmatprep.subr.mxu0 0.0
    %790 = vmatpush1.msra.mxu0 0.0
    %791 = vmatprep.subr.mxu0 0.0
    %792 = vmatpush1.msra.mxu0 0.0
    %793 = vmatprep.subr.mxu0 0.0
    %794 = vmatpush1.msra.mxu0 0.0
    %795 = vmatprep.mubr.f32.mxu0 0.0
    %796 = vmatmul.mubr.f32.gmra.mrb[0].mxu0 %v638
    %v797 = vpop.f32.mrb[0].mxu0
    %v798 = vadd.f32 0.0, %v797
    %v799 = vpop.f32.mrb[0].mxu0
    %800 = vdwg.mxu0
    %802 = vrot.lane.b32.xlu0 %v730, 32
    %v803 = vpop.permute.xlu0 %802
    %v804 = vsel %vm198, %v803, 0
    %806 = vmatprep.subr.mxu0 0.0
    %807 = vmatpush1.msra.mxu0 %v272
    %808 = vmatprep.subr.mxu0 0.0
    %809 = vmatpush1.msra.mxu0 %v273
    %810 = vmatprep.subr.mxu0 0.0
    %811 = vmatpush1.msra.mxu0 %v274
    %812 = vmatprep.subr.mxu0 0.0
    %813 = vmatpush1.msra.mxu0 %v275
    %814 = vmatprep.subr.mxu0 0.0
    %815 = vmatpush1.msra.mxu0 0.0
    %816 = vmatprep.subr.mxu0 0.0
    %817 = vmatpush1.msra.mxu0 0.0
    %818 = vmatprep.subr.mxu0 0.0
    %819 = vmatpush1.msra.mxu0 0.0
    %820 = vmatprep.subr.mxu0 0.0
    %821 = vmatpush1.msra.mxu0 0.0
    %822 = vmatprep.subr.mxu0 0.0
    %823 = vmatpush1.msra.mxu0 0.0
    %824 = vmatprep.subr.mxu0 0.0
    %825 = vmatpush1.msra.mxu0 0.0
    %826 = vmatprep.subr.mxu0 0.0
    %827 = vmatpush1.msra.mxu0 0.0
    %828 = vmatprep.subr.mxu0 0.0
    %829 = vmatpush1.msra.mxu0 0.0
    %830 = vmatprep.subr.mxu0 0.0
    %831 = vmatpush1.msra.mxu0 0.0
    %832 = vmatprep.subr.mxu0 0.0
    %833 = vmatpush1.msra.mxu0 0.0
    %834 = vmatprep.subr.mxu0 0.0
    %835 = vmatpush1.msra.mxu0 0.0
    %836 = vmatprep.subr.mxu0 0.0
    %837 = vmatpush1.msra.mxu0 0.0
    %838 = vmatprep.subr.mxu0 0.0
    %839 = vmatpush1.msra.mxu0 0.0
    %840 = vmatprep.subr.mxu0 0.0
    %841 = vmatpush1.msra.mxu0 0.0
    %842 = vmatprep.subr.mxu0 0.0
    %843 = vmatpush1.msra.mxu0 0.0
    %844 = vmatprep.subr.mxu0 0.0
    %845 = vmatpush1.msra.mxu0 0.0
    %846 = vmatprep.subr.mxu0 0.0
    %847 = vmatpush1.msra.mxu0 0.0
    %848 = vmatprep.subr.mxu0 0.0
    %849 = vmatpush1.msra.mxu0 0.0
    %850 = vmatprep.subr.mxu0 0.0
    %851 = vmatpush1.msra.mxu0 0.0
    %852 = vmatprep.subr.mxu0 0.0
    %853 = vmatpush1.msra.mxu0 0.0
    %854 = vmatprep.subr.mxu0 0.0
    %855 = vmatpush1.msra.mxu0 0.0
    %856 = vmatprep.subr.mxu0 0.0
    %857 = vmatpush1.msra.mxu0 0.0
    %858 = vmatprep.subr.mxu0 0.0
    %859 = vmatpush1.msra.mxu0 0.0
    %860 = vmatprep.subr.mxu0 0.0
    %861 = vmatpush1.msra.mxu0 0.0
    %862 = vmatprep.subr.mxu0 0.0
    %863 = vmatpush1.msra.mxu0 0.0
    %864 = vmatprep.subr.mxu0 0.0
    %865 = vmatpush1.msra.mxu0 0.0
    %866 = vmatprep.subr.mxu0 0.0
    %867 = vmatpush1.msra.mxu0 0.0
    %868 = vmatprep.subr.mxu0 0.0
    %869 = vmatpush1.msra.mxu0 0.0
    %870 = vmatprep.mubr.f32.mxu0 0.0
    %871 = vmatmul.mubr.f32.gmra.mrb[0].mxu0 %v804
    %v872 = vpop.f32.mrb[0].mxu0
    %v873 = vadd.f32 %v192, %v872
    %v874 = vpop.f32.mrb[0].mxu0
    %875 = vdwg.mxu0
    %v876 = vadd.f32 %v152, %v798
    %v877 = vmul.f32 %v876, %v185
    %v878 = vtanh.pop %v877
    %v879 = vmul.f32 %v878, %v185
    %v880 = vadd.f32 %v879, %v186
    %v881 = vmul.f32 %v880, %v628
    %883 = vrot.lane.b32.xlu0 %v880, 64
    %v884 = vpop.permute.xlu0 %883
    %v886 = vmul.f32 %v880, %v884
    %888 = vrot.lane.b32.xlu0 %v886, 32
    %v889 = vpop.permute.xlu0 %888
    %v891 = vadd.f32 %v881, %v889
    %v892 = vtanh.pop %v891
    %894 = vrot.lane.b32.xlu0 %v892, 64
    %v895 = vpop.permute.xlu0 %894
    %v897 = vmul.f32 %v880, %v895
    %899 = vrot.lane.b32.xlu0 %v897, 32
    %v900 = vpop.permute.xlu0 %899
    %v901 = vsel %vm198, %v900, 0
    %903 = vmatprep.subr.mxu0 0.0
    %904 = vmatpush1.msra.mxu0 %v368
    %905 = vmatprep.subr.mxu0 0.0
    %906 = vmatpush1.msra.mxu0 %v369
    %907 = vmatprep.subr.mxu0 0.0
    %908 = vmatpush1.msra.mxu0 %v370
    %909 = vmatprep.subr.mxu0 0.0
    %910 = vmatpush1.msra.mxu0 %v371
    %911 = vmatprep.subr.mxu0 0.0
    %912 = vmatpush1.msra.mxu0 0.0
    %913 = vmatprep.subr.mxu0 0.0
    %914 = vmatpush1.msra.mxu0 0.0
    %915 = vmatprep.subr.mxu0 0.0
    %916 = vmatpush1.msra.mxu0 0.0
    %917 = vmatprep.subr.mxu0 0.0
    %918 = vmatpush1.msra.mxu0 0.0
    %919 = vmatprep.subr.mxu0 0.0
    %920 = vmatpush1.msra.mxu0 0.0
    %921 = vmatprep.subr.mxu0 0.0
    %922 = vmatpush1.msra.mxu0 0.0
    %923 = vmatprep.subr.mxu0 0.0
    %924 = vmatpush1.msra.mxu0 0.0
    %925 = vmatprep.subr.mxu0 0.0
    %926 = vmatpush1.msra.mxu0 0.0
    %927 = vmatprep.subr.mxu0 0.0
    %928 = vmatpush1.msra.mxu0 0.0
    %929 = vmatprep.subr.mxu0 0.0
    %930 = vmatpush1.msra.mxu0 0.0
    %931 = vmatprep.subr.mxu0 0.0
    %932 = vmatpush1.msra.mxu0 0.0
    %933 = vmatprep.subr.mxu0 0.0
    %934 = vmatpush1.msra.mxu0 0.0
    %935 = vmatprep.subr.mxu0 0.0
    %936 = vmatpush1.msra.mxu0 0.0
    %937 = vmatprep.subr.mxu0 0.0
    %938 = vmatpush1.msra.mxu0 0.0
    %939 = vmatprep.subr.mxu0 0.0
    %940 = vmatpush1.msra.mxu0 0.0
    %941 = vmatprep.subr.mxu0 0.0
    %942 = vmatpush1.msra.mxu0 0.0
    %943 = vmatprep.subr.mxu0 0.0
    %944 = vmatpush1.msra.mxu0 0.0
    %945 = vmatprep.subr.mxu0 0.0
    %946 = vmatpush1.msra.mxu0 0.0
    %947 = vmatprep.subr.mxu0 0.0
    %948 = vmatpush1.msra.mxu0 0.0
    %949 = vmatprep.subr.mxu0 0.0
    %950 = vmatpush1.msra.mxu0 0.0
    %951 = vmatprep.subr.mxu0 0.0
    %952 = vmatpush1.msra.mxu0 0.0
    %953 = vmatprep.subr.mxu0 0.0
    %954 = vmatpush1.msra.mxu0 0.0
    %955 = vmatprep.subr.mxu0 0.0
    %956 = vmatpush1.msra.mxu0 0.0
    %957 = vmatprep.subr.mxu0 0.0
    %958 = vmatpush1.msra.mxu0 0.0
    %959 = vmatprep.subr.mxu0 0.0
    %960 = vmatpush1.msra.mxu0 0.0
    %961 = vmatprep.subr.mxu0 0.0
    %962 = vmatpush1.msra.mxu0 0.0
    %963 = vmatprep.subr.mxu0 0.0
    %964 = vmatpush1.msra.mxu0 0.0
    %965 = vmatprep.subr.mxu0 0.0
    %966 = vmatpush1.msra.mxu0 0.0
    %967 = vmatprep.mubr.f32.mxu0 0.0
    %968 = vmatmul.mubr.f32.gmra.mrb[0].mxu0 %v901
    %v969 = vpop.f32.mrb[0].mxu0
    %v970 = vadd.f32 %v873, %v969
    %v971 = vpop.f32.mrb[0].mxu0
    %972 = vdwg.mxu0
    %v973 = vmul.f32 %v970, %v185
    %v974 = vtanh.pop %v973
    %v975 = vmul.f32 %v974, %v185
    %v976 = vadd.f32 %v975, %v186
    %v977 = vmul.f32 %v976, %v724
    %979 = vrot.lane.b32.xlu0 %v976, 64
    %v980 = vpop.permute.xlu0 %979
    %v982 = vmul.f32 %v976, %v980
    %984 = vrot.lane.b32.xlu0 %v982, 32
    %v985 = vpop.permute.xlu0 %984
    %v987 = vadd.f32 %v977, %v985
    %v988 = vtanh.pop %v987
    %990 = vrot.lane.b32.xlu0 %v988, 64
    %v991 = vpop.permute.xlu0 %990
    %v993 = vmul.f32 %v976, %v991
    %994 = vmatprep.subr.mxu0 0.0
    %995 = vmatpush1.msra.mxu0 %v194
    %996 = vmatprep.subr.mxu0 0.0
    %997 = vmatpush1.msra.mxu0 %v195
    %998 = vmatprep.subr.mxu0 0.0
    %999 = vmatpush1.msra.mxu0 %v196
    %1000 = vmatprep.subr.mxu0 0.0
    %1001 = vmatpush1.msra.mxu0 %v197
    %1002 = vmatprep.subr.mxu0 0.0
    %1003 = vmatpush1.msra.mxu0 0.0
    %1004 = vmatprep.subr.mxu0 0.0
    %1005 = vmatpush1.msra.mxu0 0.0
    %1006 = vmatprep.subr.mxu0 0.0
    %1007 = vmatpush1.msra.mxu0 0.0
    %1008 = vmatprep.subr.mxu0 0.0
    %1009 = vmatpush1.msra.mxu0 0.0
    %1010 = vmatprep.subr.mxu0 0.0
    %1011 = vmatpush1.msra.mxu0 0.0
    %1012 = vmatprep.subr.mxu0 0.0
    %1013 = vmatpush1.msra.mxu0 0.0
    %1014 = vmatprep.subr.mxu0 0.0
    %1015 = vmatpush1.msra.mxu0 0.0
    %1016 = vmatprep.subr.mxu0 0.0
    %1017 = vmatpush1.msra.mxu0 0.0
    %1018 = vmatprep.subr.mxu0 0.0
    %1019 = vmatpush1.msra.mxu0 0.0
    %1020 = vmatprep.subr.mxu0 0.0
    %1021 = vmatpush1.msra.mxu0 0.0
    %1022 = vmatprep.subr.mxu0 0.0
    %1023 = vmatpush1.msra.mxu0 0.0
    %1024 = vmatprep.subr.mxu0 0.0
    %1025 = vmatpush1.msra.mxu0 0.0
    %1026 = vmatprep.subr.mxu0 0.0
    %1027 = vmatpush1.msra.mxu0 0.0
    %1028 = vmatprep.subr.mxu0 0.0
    %1029 = vmatpush1.msra.mxu0 0.0
    %1030 = vmatprep.subr.mxu0 0.0
    %1031 = vmatpush1.msra.mxu0 0.0
    %1032 = vmatprep.subr.mxu0 0.0
    %1033 = vmatpush1.msra.mxu0 0.0
    %1034 = vmatprep.subr.mxu0 0.0
    %1035 = vmatpush1.msra.mxu0 0.0
    %1036 = vmatprep.subr.mxu0 0.0
    %1037 = vmatpush1.msra.mxu0 0.0
    %1038 = vmatprep.subr.mxu0 0.0
    %1039 = vmatpush1.msra.mxu0 0.0
    %1040 = vmatprep.subr.mxu0 0.0
    %1041 = vmatpush1.msra.mxu0 0.0
    %1042 = vmatprep.subr.mxu0 0.0
    %1043 = vmatpush1.msra.mxu0 0.0
    %1044 = vmatprep.subr.mxu0 0.0
    %1045 = vmatpush1.msra.mxu0 0.0
    %1046 = vmatprep.subr.mxu0 0.0
    %1047 = vmatpush1.msra.mxu0 0.0
    %1048 = vmatprep.subr.mxu0 0.0
    %1049 = vmatpush1.msra.mxu0 0.0
    %1050 = vmatprep.subr.mxu0 0.0
    %1051 = vmatpush1.msra.mxu0 0.0
    %1052 = vmatprep.subr.mxu0 0.0
    %1053 = vmatpush1.msra.mxu0 0.0
    %1054 = vmatprep.subr.mxu0 0.0
    %1055 = vmatpush1.msra.mxu0 0.0
    %1056 = vmatprep.subr.mxu0 0.0
    %1057 = vmatpush1.msra.mxu0 0.0
    %1058 = vmatprep.mubr.f32.mxu0 0.0
    %1059 = vmatmul.mubr.f32.gmra.mrb[0].mxu0 %v901
    %v1060 = vpop.f32.mrb[0].mxu0
    %v1061 = vadd.f32 0.0, %v1060
    %v1062 = vpop.f32.mrb[0].mxu0
    %1063 = vdwg.mxu0
    %1065 = vrot.lane.b32.xlu0 %v993, 32
    %v1066 = vpop.permute.xlu0 %1065
    %v1067 = vsel %vm198, %v1066, 0
    %1069 = vmatprep.subr.mxu0 0.0
    %1070 = vmatpush1.msra.mxu0 %v272
    %1071 = vmatprep.subr.mxu0 0.0
    %1072 = vmatpush1.msra.mxu0 %v273
    %1073 = vmatprep.subr.mxu0 0.0
    %1074 = vmatpush1.msra.mxu0 %v274
    %1075 = vmatprep.subr.mxu0 0.0
    %1076 = vmatpush1.msra.mxu0 %v275
    %1077 = vmatprep.subr.mxu0 0.0
    %1078 = vmatpush1.msra.mxu0 0.0
    %1079 = vmatprep.subr.mxu0 0.0
    %1080 = vmatpush1.msra.mxu0 0.0
    %1081 = vmatprep.subr.mxu0 0.0
    %1082 = vmatpush1.msra.mxu0 0.0
    %1083 = vmatprep.subr.mxu0 0.0
    %1084 = vmatpush1.msra.mxu0 0.0
    %1085 = vmatprep.subr.mxu0 0.0
    %1086 = vmatpush1.msra.mxu0 0.0
    %1087 = vmatprep.subr.mxu0 0.0
    %1088 = vmatpush1.msra.mxu0 0.0
    %1089 = vmatprep.subr.mxu0 0.0
    %1090 = vmatpush1.msra.mxu0 0.0
    %1091 = vmatprep.subr.mxu0 0.0
    %1092 = vmatpush1.msra.mxu0 0.0
    %1093 = vmatprep.subr.mxu0 0.0
    %1094 = vmatpush1.msra.mxu0 0.0
    %1095 = vmatprep.subr.mxu0 0.0
    %1096 = vmatpush1.msra.mxu0 0.0
    %1097 = vmatprep.subr.mxu0 0.0
    %1098 = vmatpush1.msra.mxu0 0.0
    %1099 = vmatprep.subr.mxu0 0.0
    %1100 = vmatpush1.msra.mxu0 0.0
    %1101 = vmatprep.subr.mxu0 0.0
    %1102 = vmatpush1.msra.mxu0 0.0
    %1103 = vmatprep.subr.mxu0 0.0
    %1104 = vmatpush1.msra.mxu0 0.0
    %1105 = vmatprep.subr.mxu0 0.0
    %1106 = vmatpush1.msra.mxu0 0.0
    %1107 = vmatprep.subr.mxu0 0.0
    %1108 = vmatpush1.msra.mxu0 0.0
    %1109 = vmatprep.subr.mxu0 0.0
    %1110 = vmatpush1.msra.mxu0 0.0
    %1111 = vmatprep.subr.mxu0 0.0
    %1112 = vmatpush1.msra.mxu0 0.0
    %1113 = vmatprep.subr.mxu0 0.0
    %1114 = vmatpush1.msra.mxu0 0.0
    %1115 = vmatprep.subr.mxu0 0.0
    %1116 = vmatpush1.msra.mxu0 0.0
    %1117 = vmatprep.subr.mxu0 0.0
    %1118 = vmatpush1.msra.mxu0 0.0
    %1119 = vmatprep.subr.mxu0 0.0
    %1120 = vmatpush1.msra.mxu0 0.0
    %1121 = vmatprep.subr.mxu0 0.0
    %1122 = vmatpush1.msra.mxu0 0.0
    %1123 = vmatprep.subr.mxu0 0.0
    %1124 = vmatpush1.msra.mxu0 0.0
    %1125 = vmatprep.subr.mxu0 0.0
    %1126 = vmatpush1.msra.mxu0 0.0
    %1127 = vmatprep.subr.mxu0 0.0
    %1128 = vmatpush1.msra.mxu0 0.0
    %1129 = vmatprep.subr.mxu0 0.0
    %1130 = vmatpush1.msra.mxu0 0.0
    %1131 = vmatprep.subr.mxu0 0.0
    %1132 = vmatpush1.msra.mxu0 0.0
    %1133 = vmatprep.mubr.f32.mxu0 0.0
    %1134 = vmatmul.mubr.f32.gmra.mrb[0].mxu0 %v1067
    %v1135 = vpop.f32.mrb[0].mxu0
    %v1136 = vadd.f32 %v192, %v1135
    %v1137 = vpop.f32.mrb[0].mxu0
    %1138 = vdwg.mxu0
    %v1139 = vadd.f32 %v157, %v1061
    %v1140 = vmul.f32 %v1139, %v185
    %v1141 = vtanh.pop %v1140
    %v1142 = vmul.f32 %v1141, %v185
    %v1143 = vadd.f32 %v1142, %v186
    %v1144 = vmul.f32 %v1143, %v891
    %1146 = vrot.lane.b32.xlu0 %v1143, 64
    %v1147 = vpop.permute.xlu0 %1146
    %v1149 = vmul.f32 %v1143, %v1147
    %1151 = vrot.lane.b32.xlu0 %v1149, 32
    %v1152 = vpop.permute.xlu0 %1151
    %v1154 = vadd.f32 %v1144, %v1152
    %v1155 = vtanh.pop %v1154
    %1157 = vrot.lane.b32.xlu0 %v1155, 64
    %v1158 = vpop.permute.xlu0 %1157
    %v1160 = vmul.f32 %v1143, %v1158
    %1162 = vrot.lane.b32.xlu0 %v1160, 32
    %v1163 = vpop.permute.xlu0 %1162
    %v1164 = vsel %vm198, %v1163, 0
    %1166 = vmatprep.subr.mxu0 0.0
    %1167 = vmatpush1.msra.mxu0 %v368
    %1168 = vmatprep.subr.mxu0 0.0
    %1169 = vmatpush1.msra.mxu0 %v369
    %1170 = vmatprep.subr.mxu0 0.0
    %1171 = vmatpush1.msra.mxu0 %v370
    %1172 = vmatprep.subr.mxu0 0.0
    %1173 = vmatpush1.msra.mxu0 %v371
    %1174 = vmatprep.subr.mxu0 0.0
    %1175 = vmatpush1.msra.mxu0 0.0
    %1176 = vmatprep.subr.mxu0 0.0
    %1177 = vmatpush1.msra.mxu0 0.0
    %1178 = vmatprep.subr.mxu0 0.0
    %1179 = vmatpush1.msra.mxu0 0.0
    %1180 = vmatprep.subr.mxu0 0.0
    %1181 = vmatpush1.msra.mxu0 0.0
    %1182 = vmatprep.subr.mxu0 0.0
    %1183 = vmatpush1.msra.mxu0 0.0
    %1184 = vmatprep.subr.mxu0 0.0
    %1185 = vmatpush1.msra.mxu0 0.0
    %1186 = vmatprep.subr.mxu0 0.0
    %1187 = vmatpush1.msra.mxu0 0.0
    %1188 = vmatprep.subr.mxu0 0.0
    %1189 = vmatpush1.msra.mxu0 0.0
    %1190 = vmatprep.subr.mxu0 0.0
    %1191 = vmatpush1.msra.mxu0 0.0
    %1192 = vmatprep.subr.mxu0 0.0
    %1193 = vmatpush1.msra.mxu0 0.0
    %1194 = vmatprep.subr.mxu0 0.0
    %1195 = vmatpush1.msra.mxu0 0.0
    %1196 = vmatprep.subr.mxu0 0.0
    %1197 = vmatpush1.msra.mxu0 0.0
    %1198 = vmatprep.subr.mxu0 0.0
    %1199 = vmatpush1.msra.mxu0 0.0
    %1200 = vmatprep.subr.mxu0 0.0
    %1201 = vmatpush1.msra.mxu0 0.0
    %1202 = vmatprep.subr.mxu0 0.0
    %1203 = vmatpush1.msra.mxu0 0.0
    %1204 = vmatprep.subr.mxu0 0.0
    %1205 = vmatpush1.msra.mxu0 0.0
    %1206 = vmatprep.subr.mxu0 0.0
    %1207 = vmatpush1.msra.mxu0 0.0
    %1208 = vmatprep.subr.mxu0 0.0
    %1209 = vmatpush1.msra.mxu0 0.0
    %1210 = vmatprep.subr.mxu0 0.0
    %1211 = vmatpush1.msra.mxu0 0.0
    %1212 = vmatprep.subr.mxu0 0.0
    %1213 = vmatpush1.msra.mxu0 0.0
    %1214 = vmatprep.subr.mxu0 0.0
    %1215 = vmatpush1.msra.mxu0 0.0
    %1216 = vmatprep.subr.mxu0 0.0
    %1217 = vmatpush1.msra.mxu0 0.0
    %1218 = vmatprep.subr.mxu0 0.0
    %1219 = vmatpush1.msra.mxu0 0.0
    %1220 = vmatprep.subr.mxu0 0.0
    %1221 = vmatpush1.msra.mxu0 0.0
    %1222 = vmatprep.subr.mxu0 0.0
    %1223 = vmatpush1.msra.mxu0 0.0
    %1224 = vmatprep.subr.mxu0 0.0
    %1225 = vmatpush1.msra.mxu0 0.0
    %1226 = vmatprep.subr.mxu0 0.0
    %1227 = vmatpush1.msra.mxu0 0.0
    %1228 = vmatprep.subr.mxu0 0.0
    %1229 = vmatpush1.msra.mxu0 0.0
    %1230 = vmatprep.mubr.f32.mxu0 0.0
    %1231 = vmatmul.mubr.f32.gmra.mrb[0].mxu0 %v1164
    %v1232 = vpop.f32.mrb[0].mxu0
    %v1233 = vadd.f32 %v1136, %v1232
    %v1234 = vpop.f32.mrb[0].mxu0
    %1235 = vdwg.mxu0
    %v1236 = vmul.f32 %v1233, %v185
    %v1237 = vtanh.pop %v1236
    %v1238 = vmul.f32 %v1237, %v185
    %v1239 = vadd.f32 %v1238, %v186
    %v1240 = vmul.f32 %v1239, %v987
    %1242 = vrot.lane.b32.xlu0 %v1239, 64
    %v1243 = vpop.permute.xlu0 %1242
    %v1245 = vmul.f32 %v1239, %v1243
    %1247 = vrot.lane.b32.xlu0 %v1245, 32
    %v1248 = vpop.permute.xlu0 %1247
    %v1250 = vadd.f32 %v1240, %v1248
    %v1251 = vtanh.pop %v1250
    %1253 = vrot.lane.b32.xlu0 %v1251, 64
    %v1254 = vpop.permute.xlu0 %1253
    %v1256 = vmul.f32 %v1239, %v1254
    %1257 = vmatprep.subr.mxu0 0.0
    %1258 = vmatpush1.msra.mxu0 %v194
    %1259 = vmatprep.subr.mxu0 0.0
    %1260 = vmatpush1.msra.mxu0 %v195
    %1261 = vmatprep.subr.mxu0 0.0
    %1262 = vmatpush1.msra.mxu0 %v196
    %1263 = vmatprep.subr.mxu0 0.0
    %1264 = vmatpush1.msra.mxu0 %v197
    %1265 = vmatprep.subr.mxu0 0.0
    %1266 = vmatpush1.msra.mxu0 0.0
    %1267 = vmatprep.subr.mxu0 0.0
    %1268 = vmatpush1.msra.mxu0 0.0
    %1269 = vmatprep.subr.mxu0 0.0
    %1270 = vmatpush1.msra.mxu0 0.0
    %1271 = vmatprep.subr.mxu0 0.0
    %1272 = vmatpush1.msra.mxu0 0.0
    %1273 = vmatprep.subr.mxu0 0.0
    %1274 = vmatpush1.msra.mxu0 0.0
    %1275 = vmatprep.subr.mxu0 0.0
    %1276 = vmatpush1.msra.mxu0 0.0
    %1277 = vmatprep.subr.mxu0 0.0
    %1278 = vmatpush1.msra.mxu0 0.0
    %1279 = vmatprep.subr.mxu0 0.0
    %1280 = vmatpush1.msra.mxu0 0.0
    %1281 = vmatprep.subr.mxu0 0.0
    %1282 = vmatpush1.msra.mxu0 0.0
    %1283 = vmatprep.subr.mxu0 0.0
    %1284 = vmatpush1.msra.mxu0 0.0
    %1285 = vmatprep.subr.mxu0 0.0
    %1286 = vmatpush1.msra.mxu0 0.0
    %1287 = vmatprep.subr.mxu0 0.0
    %1288 = vmatpush1.msra.mxu0 0.0
    %1289 = vmatprep.subr.mxu0 0.0
    %1290 = vmatpush1.msra.mxu0 0.0
    %1291 = vmatprep.subr.mxu0 0.0
    %1292 = vmatpush1.msra.mxu0 0.0
    %1293 = vmatprep.subr.mxu0 0.0
    %1294 = vmatpush1.msra.mxu0 0.0
    %1295 = vmatprep.subr.mxu0 0.0
    %1296 = vmatpush1.msra.mxu0 0.0
    %1297 = vmatprep.subr.mxu0 0.0
    %1298 = vmatpush1.msra.mxu0 0.0
    %1299 = vmatprep.subr.mxu0 0.0
    %1300 = vmatpush1.msra.mxu0 0.0
    %1301 = vmatprep.subr.mxu0 0.0
    %1302 = vmatpush1.msra.mxu0 0.0
    %1303 = vmatprep.subr.mxu0 0.0
    %1304 = vmatpush1.msra.mxu0 0.0
    %1305 = vmatprep.subr.mxu0 0.0
    %1306 = vmatpush1.msra.mxu0 0.0
    %1307 = vmatprep.subr.mxu0 0.0
    %1308 = vmatpush1.msra.mxu0 0.0
    %1309 = vmatprep.subr.mxu0 0.0
    %1310 = vmatpush1.msra.mxu0 0.0
    %1311 = vmatprep.subr.mxu0 0.0
    %1312 = vmatpush1.msra.mxu0 0.0
    %1313 = vmatprep.subr.mxu0 0.0
    %1314 = vmatpush1.msra.mxu0 0.0
    %1315 = vmatprep.subr.mxu0 0.0
    %1316 = vmatpush1.msra.mxu0 0.0
    %1317 = vmatprep.subr.mxu0 0.0
    %1318 = vmatpush1.msra.mxu0 0.0
    %1319 = vmatprep.subr.mxu0 0.0
    %1320 = vmatpush1.msra.mxu0 0.0
    %1321 = vmatprep.mubr.f32.mxu0 0.0
    %1322 = vmatmul.mubr.f32.gmra.mrb[0].mxu0 %v1164
    %v1323 = vpop.f32.mrb[0].mxu0
    %v1324 = vadd.f32 0.0, %v1323
    %v1325 = vpop.f32.mrb[0].mxu0
    %1326 = vdwg.mxu0
    %1328 = vrot.lane.b32.xlu0 %v1256, 32
    %v1329 = vpop.permute.xlu0 %1328
    %v1330 = vsel %vm198, %v1329, 0
    %1332 = vmatprep.subr.mxu0 0.0
    %1333 = vmatpush1.msra.mxu0 %v272
    %1334 = vmatprep.subr.mxu0 0.0
    %1335 = vmatpush1.msra.mxu0 %v273
    %1336 = vmatprep.subr.mxu0 0.0
    %1337 = vmatpush1.msra.mxu0 %v274
    %1338 = vmatprep.subr.mxu0 0.0
    %1339 = vmatpush1.msra.mxu0 %v275
    %1340 = vmatprep.subr.mxu0 0.0
    %1341 = vmatpush1.msra.mxu0 0.0
    %1342 = vmatprep.subr.mxu0 0.0
    %1343 = vmatpush1.msra.mxu0 0.0
    %1344 = vmatprep.subr.mxu0 0.0
    %1345 = vmatpush1.msra.mxu0 0.0
    %1346 = vmatprep.subr.mxu0 0.0
    %1347 = vmatpush1.msra.mxu0 0.0
    %1348 = vmatprep.subr.mxu0 0.0
    %1349 = vmatpush1.msra.mxu0 0.0
    %1350 = vmatprep.subr.mxu0 0.0
    %1351 = vmatpush1.msra.mxu0 0.0
    %1352 = vmatprep.subr.mxu0 0.0
    %1353 = vmatpush1.msra.mxu0 0.0
    %1354 = vmatprep.subr.mxu0 0.0
    %1355 = vmatpush1.msra.mxu0 0.0
    %1356 = vmatprep.subr.mxu0 0.0
    %1357 = vmatpush1.msra.mxu0 0.0
    %1358 = vmatprep.subr.mxu0 0.0
    %1359 = vmatpush1.msra.mxu0 0.0
    %1360 = vmatprep.subr.mxu0 0.0
    %1361 = vmatpush1.msra.mxu0 0.0
    %1362 = vmatprep.subr.mxu0 0.0
    %1363 = vmatpush1.msra.mxu0 0.0
    %1364 = vmatprep.subr.mxu0 0.0
    %1365 = vmatpush1.msra.mxu0 0.0
    %1366 = vmatprep.subr.mxu0 0.0
    %1367 = vmatpush1.msra.mxu0 0.0
    %1368 = vmatprep.subr.mxu0 0.0
    %1369 = vmatpush1.msra.mxu0 0.0
    %1370 = vmatprep.subr.mxu0 0.0
    %1371 = vmatpush1.msra.mxu0 0.0
    %1372 = vmatprep.subr.mxu0 0.0
    %1373 = vmatpush1.msra.mxu0 0.0
    %1374 = vmatprep.subr.mxu0 0.0
    %1375 = vmatpush1.msra.mxu0 0.0
    %1376 = vmatprep.subr.mxu0 0.0
    %1377 = vmatpush1.msra.mxu0 0.0
    %1378 = vmatprep.subr.mxu0 0.0
    %1379 = vmatpush1.msra.mxu0 0.0
    %1380 = vmatprep.subr.mxu0 0.0
    %1381 = vmatpush1.msra.mxu0 0.0
    %1382 = vmatprep.subr.mxu0 0.0
    %1383 = vmatpush1.msra.mxu0 0.0
    %1384 = vmatprep.subr.mxu0 0.0
    %1385 = vmatpush1.msra.mxu0 0.0
    %1386 = vmatprep.subr.mxu0 0.0
    %1387 = vmatpush1.msra.mxu0 0.0
    %1388 = vmatprep.subr.mxu0 0.0
    %1389 = vmatpush1.msra.mxu0 0.0
    %1390 = vmatprep.subr.mxu0 0.0
    %1391 = vmatpush1.msra.mxu0 0.0
    %1392 = vmatprep.subr.mxu0 0.0
    %1393 = vmatpush1.msra.mxu0 0.0
    %1394 = vmatprep.subr.mxu0 0.0
    %1395 = vmatpush1.msra.mxu0 0.0
    %1396 = vmatprep.mubr.f32.mxu0 0.0
    %1397 = vmatmul.mubr.f32.gmra.mrb[0].mxu0 %v1330
    %v1398 = vpop.f32.mrb[0].mxu0
    %v1399 = vadd.f32 %v192, %v1398
    %v1400 = vpop.f32.mrb[0].mxu0
    %1401 = vdwg.mxu0
    %v1402 = vadd.f32 %v162, %v1324
    %v1403 = vmul.f32 %v1402, %v185
    %v1404 = vtanh.pop %v1403
    %v1405 = vmul.f32 %v1404, %v185
    %v1406 = vadd.f32 %v1405, %v186
    %v1407 = vmul.f32 %v1406, %v1154
    %1409 = vrot.lane.b32.xlu0 %v1406, 64
    %v1410 = vpop.permute.xlu0 %1409
    %v1412 = vmul.f32 %v1406, %v1410
    %1414 = vrot.lane.b32.xlu0 %v1412, 32
    %v1415 = vpop.permute.xlu0 %1414
    %v1417 = vadd.f32 %v1407, %v1415
    %v1418 = vtanh.pop %v1417
    %1420 = vrot.lane.b32.xlu0 %v1418, 64
    %v1421 = vpop.permute.xlu0 %1420
    %v1423 = vmul.f32 %v1406, %v1421
    %1425 = vrot.lane.b32.xlu0 %v1423, 32
    %v1426 = vpop.permute.xlu0 %1425
    %v1427 = vsel %vm198, %v1426, 0
    %1429 = vmatprep.subr.mxu0 0.0
    %1430 = vmatpush1.msra.mxu0 %v368
    %1431 = vmatprep.subr.mxu0 0.0
    %1432 = vmatpush1.msra.mxu0 %v369
    %1433 = vmatprep.subr.mxu0 0.0
    %1434 = vmatpush1.msra.mxu0 %v370
    %1435 = vmatprep.subr.mxu0 0.0
    %1436 = vmatpush1.msra.mxu0 %v371
    %1437 = vmatprep.subr.mxu0 0.0
    %1438 = vmatpush1.msra.mxu0 0.0
    %1439 = vmatprep.subr.mxu0 0.0
    %1440 = vmatpush1.msra.mxu0 0.0
    %1441 = vmatprep.subr.mxu0 0.0
    %1442 = vmatpush1.msra.mxu0 0.0
    %1443 = vmatprep.subr.mxu0 0.0
    %1444 = vmatpush1.msra.mxu0 0.0
    %1445 = vmatprep.subr.mxu0 0.0
    %1446 = vmatpush1.msra.mxu0 0.0
    %1447 = vmatprep.subr.mxu0 0.0
    %1448 = vmatpush1.msra.mxu0 0.0
    %1449 = vmatprep.subr.mxu0 0.0
    %1450 = vmatpush1.msra.mxu0 0.0
    %1451 = vmatprep.subr.mxu0 0.0
    %1452 = vmatpush1.msra.mxu0 0.0
    %1453 = vmatprep.subr.mxu0 0.0
    %1454 = vmatpush1.msra.mxu0 0.0
    %1455 = vmatprep.subr.mxu0 0.0
    %1456 = vmatpush1.msra.mxu0 0.0
    %1457 = vmatprep.subr.mxu0 0.0
    %1458 = vmatpush1.msra.mxu0 0.0
    %1459 = vmatprep.subr.mxu0 0.0
    %1460 = vmatpush1.msra.mxu0 0.0
    %1461 = vmatprep.subr.mxu0 0.0
    %1462 = vmatpush1.msra.mxu0 0.0
    %1463 = vmatprep.subr.mxu0 0.0
    %1464 = vmatpush1.msra.mxu0 0.0
    %1465 = vmatprep.subr.mxu0 0.0
    %1466 = vmatpush1.msra.mxu0 0.0
    %1467 = vmatprep.subr.mxu0 0.0
    %1468 = vmatpush1.msra.mxu0 0.0
    %1469 = vmatprep.subr.mxu0 0.0
    %1470 = vmatpush1.msra.mxu0 0.0
    %1471 = vmatprep.subr.mxu0 0.0
    %1472 = vmatpush1.msra.mxu0 0.0
    %1473 = vmatprep.subr.mxu0 0.0
    %1474 = vmatpush1.msra.mxu0 0.0
    %1475 = vmatprep.subr.mxu0 0.0
    %1476 = vmatpush1.msra.mxu0 0.0
    %1477 = vmatprep.subr.mxu0 0.0
    %1478 = vmatpush1.msra.mxu0 0.0
    %1479 = vmatprep.subr.mxu0 0.0
    %1480 = vmatpush1.msra.mxu0 0.0
    %1481 = vmatprep.subr.mxu0 0.0
    %1482 = vmatpush1.msra.mxu0 0.0
    %1483 = vmatprep.subr.mxu0 0.0
    %1484 = vmatpush1.msra.mxu0 0.0
    %1485 = vmatprep.subr.mxu0 0.0
    %1486 = vmatpush1.msra.mxu0 0.0
    %1487 = vmatprep.subr.mxu0 0.0
    %1488 = vmatpush1.msra.mxu0 0.0
    %1489 = vmatprep.subr.mxu0 0.0
    %1490 = vmatpush1.msra.mxu0 0.0
    %1491 = vmatprep.subr.mxu0 0.0
    %1492 = vmatpush1.msra.mxu0 0.0
    %1493 = vmatprep.mubr.f32.mxu0 0.0
    %1494 = vmatmul.mubr.f32.gmra.mrb[0].mxu0 %v1427
    %v1495 = vpop.f32.mrb[0].mxu0
    %v1496 = vadd.f32 %v1399, %v1495
    %v1497 = vpop.f32.mrb[0].mxu0
    %1498 = vdwg.mxu0
    %v1499 = vmul.f32 %v1496, %v185
    %v1500 = vtanh.pop %v1499
    %v1501 = vmul.f32 %v1500, %v185
    %v1502 = vadd.f32 %v1501, %v186
    %v1503 = vmul.f32 %v1502, %v1250
    %1505 = vrot.lane.b32.xlu0 %v1502, 64
    %v1506 = vpop.permute.xlu0 %1505
    %v1508 = vmul.f32 %v1502, %v1506
    %1510 = vrot.lane.b32.xlu0 %v1508, 32
    %v1511 = vpop.permute.xlu0 %1510
    %v1513 = vadd.f32 %v1503, %v1511
    %v1514 = vtanh.pop %v1513
    %1516 = vrot.lane.b32.xlu0 %v1514, 64
    %v1517 = vpop.permute.xlu0 %1516
    %v1519 = vmul.f32 %v1502, %v1517
    %1520 = vmatprep.subr.mxu0 0.0
    %1521 = vmatpush1.msra.mxu0 %v194
    %1522 = vmatprep.subr.mxu0 0.0
    %1523 = vmatpush1.msra.mxu0 %v195
    %1524 = vmatprep.subr.mxu0 0.0
    %1525 = vmatpush1.msra.mxu0 %v196
    %1526 = vmatprep.subr.mxu0 0.0
    %1527 = vmatpush1.msra.mxu0 %v197
    %1528 = vmatprep.subr.mxu0 0.0
    %1529 = vmatpush1.msra.mxu0 0.0
    %1530 = vmatprep.subr.mxu0 0.0
    %1531 = vmatpush1.msra.mxu0 0.0
    %1532 = vmatprep.subr.mxu0 0.0
    %1533 = vmatpush1.msra.mxu0 0.0
    %1534 = vmatprep.subr.mxu0 0.0
    %1535 = vmatpush1.msra.mxu0 0.0
    %1536 = vmatprep.subr.mxu0 0.0
    %1537 = vmatpush1.msra.mxu0 0.0
    %1538 = vmatprep.subr.mxu0 0.0
    %1539 = vmatpush1.msra.mxu0 0.0
    %1540 = vmatprep.subr.mxu0 0.0
    %1541 = vmatpush1.msra.mxu0 0.0
    %1542 = vmatprep.subr.mxu0 0.0
    %1543 = vmatpush1.msra.mxu0 0.0
    %1544 = vmatprep.subr.mxu0 0.0
    %1545 = vmatpush1.msra.mxu0 0.0
    %1546 = vmatprep.subr.mxu0 0.0
    %1547 = vmatpush1.msra.mxu0 0.0
    %1548 = vmatprep.subr.mxu0 0.0
    %1549 = vmatpush1.msra.mxu0 0.0
    %1550 = vmatprep.subr.mxu0 0.0
    %1551 = vmatpush1.msra.mxu0 0.0
    %1552 = vmatprep.subr.mxu0 0.0
    %1553 = vmatpush1.msra.mxu0 0.0
    %1554 = vmatprep.subr.mxu0 0.0
    %1555 = vmatpush1.msra.mxu0 0.0
    %1556 = vmatprep.subr.mxu0 0.0
    %1557 = vmatpush1.msra.mxu0 0.0
    %1558 = vmatprep.subr.mxu0 0.0
    %1559 = vmatpush1.msra.mxu0 0.0
    %1560 = vmatprep.subr.mxu0 0.0
    %1561 = vmatpush1.msra.mxu0 0.0
    %1562 = vmatprep.subr.mxu0 0.0
    %1563 = vmatpush1.msra.mxu0 0.0
    %1564 = vmatprep.subr.mxu0 0.0
    %1565 = vmatpush1.msra.mxu0 0.0
    %1566 = vmatprep.subr.mxu0 0.0
    %1567 = vmatpush1.msra.mxu0 0.0
    %1568 = vmatprep.subr.mxu0 0.0
    %1569 = vmatpush1.msra.mxu0 0.0
    %1570 = vmatprep.subr.mxu0 0.0
    %1571 = vmatpush1.msra.mxu0 0.0
    %1572 = vmatprep.subr.mxu0 0.0
    %1573 = vmatpush1.msra.mxu0 0.0
    %1574 = vmatprep.subr.mxu0 0.0
    %1575 = vmatpush1.msra.mxu0 0.0
    %1576 = vmatprep.subr.mxu0 0.0
    %1577 = vmatpush1.msra.mxu0 0.0
    %1578 = vmatprep.subr.mxu0 0.0
    %1579 = vmatpush1.msra.mxu0 0.0
    %1580 = vmatprep.subr.mxu0 0.0
    %1581 = vmatpush1.msra.mxu0 0.0
    %1582 = vmatprep.subr.mxu0 0.0
    %1583 = vmatpush1.msra.mxu0 0.0
    %1584 = vmatprep.mubr.f32.mxu0 0.0
    %1585 = vmatmul.mubr.f32.gmra.mrb[0].mxu0 %v1427
    %v1586 = vpop.f32.mrb[0].mxu0
    %v1587 = vadd.f32 0.0, %v1586
    %v1588 = vpop.f32.mrb[0].mxu0
    %1589 = vdwg.mxu0
    %1591 = vrot.lane.b32.xlu0 %v1519, 32
    %v1592 = vpop.permute.xlu0 %1591
    %v1593 = vsel %vm198, %v1592, 0
    %1595 = vmatprep.subr.mxu0 0.0
    %1596 = vmatpush1.msra.mxu0 %v272
    %1597 = vmatprep.subr.mxu0 0.0
    %1598 = vmatpush1.msra.mxu0 %v273
    %1599 = vmatprep.subr.mxu0 0.0
    %1600 = vmatpush1.msra.mxu0 %v274
    %1601 = vmatprep.subr.mxu0 0.0
    %1602 = vmatpush1.msra.mxu0 %v275
    %1603 = vmatprep.subr.mxu0 0.0
    %1604 = vmatpush1.msra.mxu0 0.0
    %1605 = vmatprep.subr.mxu0 0.0
    %1606 = vmatpush1.msra.mxu0 0.0
    %1607 = vmatprep.subr.mxu0 0.0
    %1608 = vmatpush1.msra.mxu0 0.0
    %1609 = vmatprep.subr.mxu0 0.0
    %1610 = vmatpush1.msra.mxu0 0.0
    %1611 = vmatprep.subr.mxu0 0.0
    %1612 = vmatpush1.msra.mxu0 0.0
    %1613 = vmatprep.subr.mxu0 0.0
    %1614 = vmatpush1.msra.mxu0 0.0
    %1615 = vmatprep.subr.mxu0 0.0
    %1616 = vmatpush1.msra.mxu0 0.0
    %1617 = vmatprep.subr.mxu0 0.0
    %1618 = vmatpush1.msra.mxu0 0.0
    %1619 = vmatprep.subr.mxu0 0.0
    %1620 = vmatpush1.msra.mxu0 0.0
    %1621 = vmatprep.subr.mxu0 0.0
    %1622 = vmatpush1.msra.mxu0 0.0
    %1623 = vmatprep.subr.mxu0 0.0
    %1624 = vmatpush1.msra.mxu0 0.0
    %1625 = vmatprep.subr.mxu0 0.0
    %1626 = vmatpush1.msra.mxu0 0.0
    %1627 = vmatprep.subr.mxu0 0.0
    %1628 = vmatpush1.msra.mxu0 0.0
    %1629 = vmatprep.subr.mxu0 0.0
    %1630 = vmatpush1.msra.mxu0 0.0
    %1631 = vmatprep.subr.mxu0 0.0
    %1632 = vmatpush1.msra.mxu0 0.0
    %1633 = vmatprep.subr.mxu0 0.0
    %1634 = vmatpush1.msra.mxu0 0.0
    %1635 = vmatprep.subr.mxu0 0.0
    %1636 = vmatpush1.msra.mxu0 0.0
    %1637 = vmatprep.subr.mxu0 0.0
    %1638 = vmatpush1.msra.mxu0 0.0
    %1639 = vmatprep.subr.mxu0 0.0
    %1640 = vmatpush1.msra.mxu0 0.0
    %1641 = vmatprep.subr.mxu0 0.0
    %1642 = vmatpush1.msra.mxu0 0.0
    %1643 = vmatprep.subr.mxu0 0.0
    %1644 = vmatpush1.msra.mxu0 0.0
    %1645 = vmatprep.subr.mxu0 0.0
    %1646 = vmatpush1.msra.mxu0 0.0
    %1647 = vmatprep.subr.mxu0 0.0
    %1648 = vmatpush1.msra.mxu0 0.0
    %1649 = vmatprep.subr.mxu0 0.0
    %1650 = vmatpush1.msra.mxu0 0.0
    %1651 = vmatprep.subr.mxu0 0.0
    %1652 = vmatpush1.msra.mxu0 0.0
    %1653 = vmatprep.subr.mxu0 0.0
    %1654 = vmatpush1.msra.mxu0 0.0
    %1655 = vmatprep.subr.mxu0 0.0
    %1656 = vmatpush1.msra.mxu0 0.0
    %1657 = vmatprep.subr.mxu0 0.0
    %1658 = vmatpush1.msra.mxu0 0.0
    %1659 = vmatprep.mubr.f32.mxu0 0.0
    %1660 = vmatmul.mubr.f32.gmra.mrb[0].mxu0 %v1593
    %v1661 = vpop.f32.mrb[0].mxu0
    %v1662 = vadd.f32 %v192, %v1661
    %v1663 = vpop.f32.mrb[0].mxu0
    %1664 = vdwg.mxu0
    %v1665 = vadd.f32 %v167, %v1587
    %v1666 = vmul.f32 %v1665, %v185
    %v1667 = vtanh.pop %v1666
    %v1668 = vmul.f32 %v1667, %v185
    %v1669 = vadd.f32 %v1668, %v186
    %v1670 = vmul.f32 %v1669, %v1417
    %1672 = vrot.lane.b32.xlu0 %v1669, 64
    %v1673 = vpop.permute.xlu0 %1672
    %v1675 = vmul.f32 %v1669, %v1673
    %1677 = vrot.lane.b32.xlu0 %v1675, 32
    %v1678 = vpop.permute.xlu0 %1677
    %v1680 = vadd.f32 %v1670, %v1678
    %v1681 = vtanh.pop %v1680
    %1683 = vrot.lane.b32.xlu0 %v1681, 64
    %v1684 = vpop.permute.xlu0 %1683
    %v1686 = vmul.f32 %v1669, %v1684
    %1688 = vrot.lane.b32.xlu0 %v1686, 32
    %v1689 = vpop.permute.xlu0 %1688
    %v1690 = vsel %vm198, %v1689, 0
    %1692 = vmatprep.subr.mxu0 0.0
    %1693 = vmatpush1.msra.mxu0 %v368
    %1694 = vmatprep.subr.mxu0 0.0
    %1695 = vmatpush1.msra.mxu0 %v369
    %1696 = vmatprep.subr.mxu0 0.0
    %1697 = vmatpush1.msra.mxu0 %v370
    %1698 = vmatprep.subr.mxu0 0.0
    %1699 = vmatpush1.msra.mxu0 %v371
    %1700 = vmatprep.subr.mxu0 0.0
    %1701 = vmatpush1.msra.mxu0 0.0
    %1702 = vmatprep.subr.mxu0 0.0
    %1703 = vmatpush1.msra.mxu0 0.0
    %1704 = vmatprep.subr.mxu0 0.0
    %1705 = vmatpush1.msra.mxu0 0.0
    %1706 = vmatprep.subr.mxu0 0.0
    %1707 = vmatpush1.msra.mxu0 0.0
    %1708 = vmatprep.subr.mxu0 0.0
    %1709 = vmatpush1.msra.mxu0 0.0
    %1710 = vmatprep.subr.mxu0 0.0
    %1711 = vmatpush1.msra.mxu0 0.0
    %1712 = vmatprep.subr.mxu0 0.0
    %1713 = vmatpush1.msra.mxu0 0.0
    %1714 = vmatprep.subr.mxu0 0.0
    %1715 = vmatpush1.msra.mxu0 0.0
    %1716 = vmatprep.subr.mxu0 0.0
    %1717 = vmatpush1.msra.mxu0 0.0
    %1718 = vmatprep.subr.mxu0 0.0
    %1719 = vmatpush1.msra.mxu0 0.0
    %1720 = vmatprep.subr.mxu0 0.0
    %1721 = vmatpush1.msra.mxu0 0.0
    %1722 = vmatprep.subr.mxu0 0.0
    %1723 = vmatpush1.msra.mxu0 0.0
    %1724 = vmatprep.subr.mxu0 0.0
    %1725 = vmatpush1.msra.mxu0 0.0
    %1726 = vmatprep.subr.mxu0 0.0
    %1727 = vmatpush1.msra.mxu0 0.0
    %1728 = vmatprep.subr.mxu0 0.0
    %1729 = vmatpush1.msra.mxu0 0.0
    %1730 = vmatprep.subr.mxu0 0.0
    %1731 = vmatpush1.msra.mxu0 0.0
    %1732 = vmatprep.subr.mxu0 0.0
    %1733 = vmatpush1.msra.mxu0 0.0
    %1734 = vmatprep.subr.mxu0 0.0
    %1735 = vmatpush1.msra.mxu0 0.0
    %1736 = vmatprep.subr.mxu0 0.0
    %1737 = vmatpush1.msra.mxu0 0.0
    %1738 = vmatprep.subr.mxu0 0.0
    %1739 = vmatpush1.msra.mxu0 0.0
    %1740 = vmatprep.subr.mxu0 0.0
    %1741 = vmatpush1.msra.mxu0 0.0
    %1742 = vmatprep.subr.mxu0 0.0
    %1743 = vmatpush1.msra.mxu0 0.0
    %1744 = vmatprep.subr.mxu0 0.0
    %1745 = vmatpush1.msra.mxu0 0.0
    %1746 = vmatprep.subr.mxu0 0.0
    %1747 = vmatpush1.msra.mxu0 0.0
    %1748 = vmatprep.subr.mxu0 0.0
    %1749 = vmatpush1.msra.mxu0 0.0
    %1750 = vmatprep.subr.mxu0 0.0
    %1751 = vmatpush1.msra.mxu0 0.0
    %1752 = vmatprep.subr.mxu0 0.0
    %1753 = vmatpush1.msra.mxu0 0.0
    %1754 = vmatprep.subr.mxu0 0.0
    %1755 = vmatpush1.msra.mxu0 0.0
    %1756 = vmatprep.mubr.f32.mxu0 0.0
    %1757 = vmatmul.mubr.f32.gmra.mrb[0].mxu0 %v1690
    %v1758 = vpop.f32.mrb[0].mxu0
    %v1759 = vadd.f32 %v1662, %v1758
    %v1760 = vpop.f32.mrb[0].mxu0
    %1761 = vdwg.mxu0
    %v1762 = vmul.f32 %v1759, %v185
    %v1763 = vtanh.pop %v1762
    %v1764 = vmul.f32 %v1763, %v185
    %v1765 = vadd.f32 %v1764, %v186
    %v1766 = vmul.f32 %v1765, %v1513
    %1768 = vrot.lane.b32.xlu0 %v1765, 64
    %v1769 = vpop.permute.xlu0 %1768
    %v1771 = vmul.f32 %v1765, %v1769
    %1773 = vrot.lane.b32.xlu0 %v1771, 32
    %v1774 = vpop.permute.xlu0 %1773
    %v1776 = vadd.f32 %v1766, %v1774
    %v1777 = vtanh.pop %v1776
    %1779 = vrot.lane.b32.xlu0 %v1777, 64
    %v1780 = vpop.permute.xlu0 %1779
    %v1782 = vmul.f32 %v1765, %v1780
    %1783 = vmatprep.subr.mxu0 0.0
    %1784 = vmatpush1.msra.mxu0 %v194
    %1785 = vmatprep.subr.mxu0 0.0
    %1786 = vmatpush1.msra.mxu0 %v195
    %1787 = vmatprep.subr.mxu0 0.0
    %1788 = vmatpush1.msra.mxu0 %v196
    %1789 = vmatprep.subr.mxu0 0.0
    %1790 = vmatpush1.msra.mxu0 %v197
    %1791 = vmatprep.subr.mxu0 0.0
    %1792 = vmatpush1.msra.mxu0 0.0
    %1793 = vmatprep.subr.mxu0 0.0
    %1794 = vmatpush1.msra.mxu0 0.0
    %1795 = vmatprep.subr.mxu0 0.0
    %1796 = vmatpush1.msra.mxu0 0.0
    %1797 = vmatprep.subr.mxu0 0.0
    %1798 = vmatpush1.msra.mxu0 0.0
    %1799 = vmatprep.subr.mxu0 0.0
    %1800 = vmatpush1.msra.mxu0 0.0
    %1801 = vmatprep.subr.mxu0 0.0
    %1802 = vmatpush1.msra.mxu0 0.0
    %1803 = vmatprep.subr.mxu0 0.0
    %1804 = vmatpush1.msra.mxu0 0.0
    %1805 = vmatprep.subr.mxu0 0.0
    %1806 = vmatpush1.msra.mxu0 0.0
    %1807 = vmatprep.subr.mxu0 0.0
    %1808 = vmatpush1.msra.mxu0 0.0
    %1809 = vmatprep.subr.mxu0 0.0
    %1810 = vmatpush1.msra.mxu0 0.0
    %1811 = vmatprep.subr.mxu0 0.0
    %1812 = vmatpush1.msra.mxu0 0.0
    %1813 = vmatprep.subr.mxu0 0.0
    %1814 = vmatpush1.msra.mxu0 0.0
    %1815 = vmatprep.subr.mxu0 0.0
    %1816 = vmatpush1.msra.mxu0 0.0
    %1817 = vmatprep.subr.mxu0 0.0
    %1818 = vmatpush1.msra.mxu0 0.0
    %1819 = vmatprep.subr.mxu0 0.0
    %1820 = vmatpush1.msra.mxu0 0.0
    %1821 = vmatprep.subr.mxu0 0.0
    %1822 = vmatpush1.msra.mxu0 0.0
    %1823 = vmatprep.subr.mxu0 0.0
    %1824 = vmatpush1.msra.mxu0 0.0
    %1825 = vmatprep.subr.mxu0 0.0
    %1826 = vmatpush1.msra.mxu0 0.0
    %1827 = vmatprep.subr.mxu0 0.0
    %1828 = vmatpush1.msra.mxu0 0.0
    %1829 = vmatprep.subr.mxu0 0.0
    %1830 = vmatpush1.msra.mxu0 0.0
    %1831 = vmatprep.subr.mxu0 0.0
    %1832 = vmatpush1.msra.mxu0 0.0
    %1833 = vmatprep.subr.mxu0 0.0
    %1834 = vmatpush1.msra.mxu0 0.0
    %1835 = vmatprep.subr.mxu0 0.0
    %1836 = vmatpush1.msra.mxu0 0.0
    %1837 = vmatprep.subr.mxu0 0.0
    %1838 = vmatpush1.msra.mxu0 0.0
    %1839 = vmatprep.subr.mxu0 0.0
    %1840 = vmatpush1.msra.mxu0 0.0
    %1841 = vmatprep.subr.mxu0 0.0
    %1842 = vmatpush1.msra.mxu0 0.0
    %1843 = vmatprep.subr.mxu0 0.0
    %1844 = vmatpush1.msra.mxu0 0.0
    %1845 = vmatprep.subr.mxu0 0.0
    %1846 = vmatpush1.msra.mxu0 0.0
    %1847 = vmatprep.mubr.f32.mxu0 0.0
    %1848 = vmatmul.mubr.f32.gmra.mrb[0].mxu0 %v1690
    %v1849 = vpop.f32.mrb[0].mxu0
    %v1850 = vadd.f32 0.0, %v1849
    %v1851 = vpop.f32.mrb[0].mxu0
    %1852 = vdwg.mxu0
    %1854 = vrot.lane.b32.xlu0 %v1782, 32
    %v1855 = vpop.permute.xlu0 %1854
    %v1856 = vsel %vm198, %v1855, 0
    %1858 = vmatprep.subr.mxu0 0.0
    %1859 = vmatpush1.msra.mxu0 %v272
    %1860 = vmatprep.subr.mxu0 0.0
    %1861 = vmatpush1.msra.mxu0 %v273
    %1862 = vmatprep.subr.mxu0 0.0
    %1863 = vmatpush1.msra.mxu0 %v274
    %1864 = vmatprep.subr.mxu0 0.0
    %1865 = vmatpush1.msra.mxu0 %v275
    %1866 = vmatprep.subr.mxu0 0.0
    %1867 = vmatpush1.msra.mxu0 0.0
    %1868 = vmatprep.subr.mxu0 0.0
    %1869 = vmatpush1.msra.mxu0 0.0
    %1870 = vmatprep.subr.mxu0 0.0
    %1871 = vmatpush1.msra.mxu0 0.0
    %1872 = vmatprep.subr.mxu0 0.0
    %1873 = vmatpush1.msra.mxu0 0.0
    %1874 = vmatprep.subr.mxu0 0.0
    %1875 = vmatpush1.msra.mxu0 0.0
    %1876 = vmatprep.subr.mxu0 0.0
    %1877 = vmatpush1.msra.mxu0 0.0
    %1878 = vmatprep.subr.mxu0 0.0
    %1879 = vmatpush1.msra.mxu0 0.0
    %1880 = vmatprep.subr.mxu0 0.0
    %1881 = vmatpush1.msra.mxu0 0.0
    %1882 = vmatprep.subr.mxu0 0.0
    %1883 = vmatpush1.msra.mxu0 0.0
    %1884 = vmatprep.subr.mxu0 0.0
    %1885 = vmatpush1.msra.mxu0 0.0
    %1886 = vmatprep.subr.mxu0 0.0
    %1887 = vmatpush1.msra.mxu0 0.0
    %1888 = vmatprep.subr.mxu0 0.0
    %1889 = vmatpush1.msra.mxu0 0.0
    %1890 = vmatprep.subr.mxu0 0.0
    %1891 = vmatpush1.msra.mxu0 0.0
    %1892 = vmatprep.subr.mxu0 0.0
    %1893 = vmatpush1.msra.mxu0 0.0
    %1894 = vmatprep.subr.mxu0 0.0
    %1895 = vmatpush1.msra.mxu0 0.0
    %1896 = vmatprep.subr.mxu0 0.0
    %1897 = vmatpush1.msra.mxu0 0.0
    %1898 = vmatprep.subr.mxu0 0.0
    %1899 = vmatpush1.msra.mxu0 0.0
    %1900 = vmatprep.subr.mxu0 0.0
    %1901 = vmatpush1.msra.mxu0 0.0
    %1902 = vmatprep.subr.mxu0 0.0
    %1903 = vmatpush1.msra.mxu0 0.0
    %1904 = vmatprep.subr.mxu0 0.0
    %1905 = vmatpush1.msra.mxu0 0.0
    %1906 = vmatprep.subr.mxu0 0.0
    %1907 = vmatpush1.msra.mxu0 0.0
    %1908 = vmatprep.subr.mxu0 0.0
    %1909 = vmatpush1.msra.mxu0 0.0
    %1910 = vmatprep.subr.mxu0 0.0
    %1911 = vmatpush1.msra.mxu0 0.0
    %1912 = vmatprep.subr.mxu0 0.0
    %1913 = vmatpush1.msra.mxu0 0.0
    %1914 = vmatprep.subr.mxu0 0.0
    %1915 = vmatpush1.msra.mxu0 0.0
    %1916 = vmatprep.subr.mxu0 0.0
    %1917 = vmatpush1.msra.mxu0 0.0
    %1918 = vmatprep.subr.mxu0 0.0
    %1919 = vmatpush1.msra.mxu0 0.0
    %1920 = vmatprep.subr.mxu0 0.0
    %1921 = vmatpush1.msra.mxu0 0.0
    %1922 = vmatprep.mubr.f32.mxu0 0.0
    %1923 = vmatmul.mubr.f32.gmra.mrb[0].mxu0 %v1856
    %v1924 = vpop.f32.mrb[0].mxu0
    %v1925 = vadd.f32 %v192, %v1924
    %v1926 = vpop.f32.mrb[0].mxu0
    %1927 = vdwg.mxu0
    %v1928 = vadd.f32 %v172, %v1850
    %v1929 = vmul.f32 %v1928, %v185
    %v1930 = vtanh.pop %v1929
    %v1931 = vmul.f32 %v1930, %v185
    %v1932 = vadd.f32 %v1931, %v186
    %v1933 = vmul.f32 %v1932, %v1680
    %1935 = vrot.lane.b32.xlu0 %v1932, 64
    %v1936 = vpop.permute.xlu0 %1935
    %v1938 = vmul.f32 %v1932, %v1936
    %1940 = vrot.lane.b32.xlu0 %v1938, 32
    %v1941 = vpop.permute.xlu0 %1940
    %v1943 = vadd.f32 %v1933, %v1941
    %v1944 = vtanh.pop %v1943
    %1946 = vrot.lane.b32.xlu0 %v1944, 64
    %v1947 = vpop.permute.xlu0 %1946
    %v1949 = vmul.f32 %v1932, %v1947
    %1951 = vrot.lane.b32.xlu0 %v1949, 32
    %v1952 = vpop.permute.xlu0 %1951
    %v1953 = vsel %vm198, %v1952, 0
    %1955 = vmatprep.subr.mxu0 0.0
    %1956 = vmatpush1.msra.mxu0 %v368
    %1957 = vmatprep.subr.mxu0 0.0
    %1958 = vmatpush1.msra.mxu0 %v369
    %1959 = vmatprep.subr.mxu0 0.0
    %1960 = vmatpush1.msra.mxu0 %v370
    %1961 = vmatprep.subr.mxu0 0.0
    %1962 = vmatpush1.msra.mxu0 %v371
    %1963 = vmatprep.subr.mxu0 0.0
    %1964 = vmatpush1.msra.mxu0 0.0
    %1965 = vmatprep.subr.mxu0 0.0
    %1966 = vmatpush1.msra.mxu0 0.0
    %1967 = vmatprep.subr.mxu0 0.0
    %1968 = vmatpush1.msra.mxu0 0.0
    %1969 = vmatprep.subr.mxu0 0.0
    %1970 = vmatpush1.msra.mxu0 0.0
    %1971 = vmatprep.subr.mxu0 0.0
    %1972 = vmatpush1.msra.mxu0 0.0
    %1973 = vmatprep.subr.mxu0 0.0
    %1974 = vmatpush1.msra.mxu0 0.0
    %1975 = vmatprep.subr.mxu0 0.0
    %1976 = vmatpush1.msra.mxu0 0.0
    %1977 = vmatprep.subr.mxu0 0.0
    %1978 = vmatpush1.msra.mxu0 0.0
    %1979 = vmatprep.subr.mxu0 0.0
    %1980 = vmatpush1.msra.mxu0 0.0
    %1981 = vmatprep.subr.mxu0 0.0
    %1982 = vmatpush1.msra.mxu0 0.0
    %1983 = vmatprep.subr.mxu0 0.0
    %1984 = vmatpush1.msra.mxu0 0.0
    %1985 = vmatprep.subr.mxu0 0.0
    %1986 = vmatpush1.msra.mxu0 0.0
    %1987 = vmatprep.subr.mxu0 0.0
    %1988 = vmatpush1.msra.mxu0 0.0
    %1989 = vmatprep.subr.mxu0 0.0
    %1990 = vmatpush1.msra.mxu0 0.0
    %1991 = vmatprep.subr.mxu0 0.0
    %1992 = vmatpush1.msra.mxu0 0.0
    %1993 = vmatprep.subr.mxu0 0.0
    %1994 = vmatpush1.msra.mxu0 0.0
    %1995 = vmatprep.subr.mxu0 0.0
    %1996 = vmatpush1.msra.mxu0 0.0
    %1997 = vmatprep.subr.mxu0 0.0
    %1998 = vmatpush1.msra.mxu0 0.0
    %1999 = vmatprep.subr.mxu0 0.0
    %2000 = vmatpush1.msra.mxu0 0.0
    %2001 = vmatprep.subr.mxu0 0.0
    %2002 = vmatpush1.msra.mxu0 0.0
    %2003 = vmatprep.subr.mxu0 0.0
    %2004 = vmatpush1.msra.mxu0 0.0
    %2005 = vmatprep.subr.mxu0 0.0
    %2006 = vmatpush1.msra.mxu0 0.0
    %2007 = vmatprep.subr.mxu0 0.0
    %2008 = vmatpush1.msra.mxu0 0.0
    %2009 = vmatprep.subr.mxu0 0.0
    %2010 = vmatpush1.msra.mxu0 0.0
    %2011 = vmatprep.subr.mxu0 0.0
    %2012 = vmatpush1.msra.mxu0 0.0
    %2013 = vmatprep.subr.mxu0 0.0
    %2014 = vmatpush1.msra.mxu0 0.0
    %2015 = vmatprep.subr.mxu0 0.0
    %2016 = vmatpush1.msra.mxu0 0.0
    %2017 = vmatprep.subr.mxu0 0.0
    %2018 = vmatpush1.msra.mxu0 0.0
    %2019 = vmatprep.mubr.f32.mxu0 0.0
    %2020 = vmatmul.mubr.f32.gmra.mrb[0].mxu0 %v1953
    %v2021 = vpop.f32.mrb[0].mxu0
    %v2022 = vadd.f32 %v1925, %v2021
    %v2023 = vpop.f32.mrb[0].mxu0
    %2024 = vdwg.mxu0
    %v2025 = vmul.f32 %v2022, %v185
    %v2026 = vtanh.pop %v2025
    %v2027 = vmul.f32 %v2026, %v185
    %v2028 = vadd.f32 %v2027, %v186
    %v2029 = vmul.f32 %v2028, %v1776
    %2031 = vrot.lane.b32.xlu0 %v2028, 64
    %v2032 = vpop.permute.xlu0 %2031
    %v2034 = vmul.f32 %v2028, %v2032
    %2036 = vrot.lane.b32.xlu0 %v2034, 32
    %v2037 = vpop.permute.xlu0 %2036
    %v2039 = vadd.f32 %v2029, %v2037
    %v2040 = vtanh.pop %v2039
    %2042 = vrot.lane.b32.xlu0 %v2040, 64
    %v2043 = vpop.permute.xlu0 %2042
    %v2045 = vmul.f32 %v2028, %v2043
    %2046 = vmatprep.subr.mxu0 0.0
    %2047 = vmatpush1.msra.mxu0 %v194
    %2048 = vmatprep.subr.mxu0 0.0
    %2049 = vmatpush1.msra.mxu0 %v195
    %2050 = vmatprep.subr.mxu0 0.0
    %2051 = vmatpush1.msra.mxu0 %v196
    %2052 = vmatprep.subr.mxu0 0.0
    %2053 = vmatpush1.msra.mxu0 %v197
    %2054 = vmatprep.subr.mxu0 0.0
    %2055 = vmatpush1.msra.mxu0 0.0
    %2056 = vmatprep.subr.mxu0 0.0
    %2057 = vmatpush1.msra.mxu0 0.0
    %2058 = vmatprep.subr.mxu0 0.0
    %2059 = vmatpush1.msra.mxu0 0.0
    %2060 = vmatprep.subr.mxu0 0.0
    %2061 = vmatpush1.msra.mxu0 0.0
    %2062 = vmatprep.subr.mxu0 0.0
    %2063 = vmatpush1.msra.mxu0 0.0
    %2064 = vmatprep.subr.mxu0 0.0
    %2065 = vmatpush1.msra.mxu0 0.0
    %2066 = vmatprep.subr.mxu0 0.0
    %2067 = vmatpush1.msra.mxu0 0.0
    %2068 = vmatprep.subr.mxu0 0.0
    %2069 = vmatpush1.msra.mxu0 0.0
    %2070 = vmatprep.subr.mxu0 0.0
    %2071 = vmatpush1.msra.mxu0 0.0
    %2072 = vmatprep.subr.mxu0 0.0
    %2073 = vmatpush1.msra.mxu0 0.0
    %2074 = vmatprep.subr.mxu0 0.0
    %2075 = vmatpush1.msra.mxu0 0.0
    %2076 = vmatprep.subr.mxu0 0.0
    %2077 = vmatpush1.msra.mxu0 0.0
    %2078 = vmatprep.subr.mxu0 0.0
    %2079 = vmatpush1.msra.mxu0 0.0
    %2080 = vmatprep.subr.mxu0 0.0
    %2081 = vmatpush1.msra.mxu0 0.0
    %2082 = vmatprep.subr.mxu0 0.0
    %2083 = vmatpush1.msra.mxu0 0.0
    %2084 = vmatprep.subr.mxu0 0.0
    %2085 = vmatpush1.msra.mxu0 0.0
    %2086 = vmatprep.subr.mxu0 0.0
    %2087 = vmatpush1.msra.mxu0 0.0
    %2088 = vmatprep.subr.mxu0 0.0
    %2089 = vmatpush1.msra.mxu0 0.0
    %2090 = vmatprep.subr.mxu0 0.0
    %2091 = vmatpush1.msra.mxu0 0.0
    %2092 = vmatprep.subr.mxu0 0.0
    %2093 = vmatpush1.msra.mxu0 0.0
    %2094 = vmatprep.subr.mxu0 0.0
    %2095 = vmatpush1.msra.mxu0 0.0
    %2096 = vmatprep.subr.mxu0 0.0
    %2097 = vmatpush1.msra.mxu0 0.0
    %2098 = vmatprep.subr.mxu0 0.0
    %2099 = vmatpush1.msra.mxu0 0.0
    %2100 = vmatprep.subr.mxu0 0.0
    %2101 = vmatpush1.msra.mxu0 0.0
    %2102 = vmatprep.subr.mxu0 0.0
    %2103 = vmatpush1.msra.mxu0 0.0
    %2104 = vmatprep.subr.mxu0 0.0
    %2105 = vmatpush1.msra.mxu0 0.0
    %2106 = vmatprep.subr.mxu0 0.0
    %2107 = vmatpush1.msra.mxu0 0.0
    %2108 = vmatprep.subr.mxu0 0.0
    %2109 = vmatpush1.msra.mxu0 0.0
    %2110 = vmatprep.mubr.f32.mxu0 0.0
    %2111 = vmatmul.mubr.f32.gmra.mrb[0].mxu0 %v1953
    %v2112 = vpop.f32.mrb[0].mxu0
    %v2113 = vadd.f32 0.0, %v2112
    %v2114 = vpop.f32.mrb[0].mxu0
    %2115 = vdwg.mxu0
    %2117 = vrot.lane.b32.xlu0 %v2045, 32
    %v2118 = vpop.permute.xlu0 %2117
    %v2119 = vsel %vm198, %v2118, 0
    %2121 = vmatprep.subr.mxu0 0.0
    %2122 = vmatpush1.msra.mxu0 %v272
    %2123 = vmatprep.subr.mxu0 0.0
    %2124 = vmatpush1.msra.mxu0 %v273
    %2125 = vmatprep.subr.mxu0 0.0
    %2126 = vmatpush1.msra.mxu0 %v274
    %2127 = vmatprep.subr.mxu0 0.0
    %2128 = vmatpush1.msra.mxu0 %v275
    %2129 = vmatprep.subr.mxu0 0.0
    %2130 = vmatpush1.msra.mxu0 0.0
    %2131 = vmatprep.subr.mxu0 0.0
    %2132 = vmatpush1.msra.mxu0 0.0
    %2133 = vmatprep.subr.mxu0 0.0
    %2134 = vmatpush1.msra.mxu0 0.0
    %2135 = vmatprep.subr.mxu0 0.0
    %2136 = vmatpush1.msra.mxu0 0.0
    %2137 = vmatprep.subr.mxu0 0.0
    %2138 = vmatpush1.msra.mxu0 0.0
    %2139 = vmatprep.subr.mxu0 0.0
    %2140 = vmatpush1.msra.mxu0 0.0
    %2141 = vmatprep.subr.mxu0 0.0
    %2142 = vmatpush1.msra.mxu0 0.0
    %2143 = vmatprep.subr.mxu0 0.0
    %2144 = vmatpush1.msra.mxu0 0.0
    %2145 = vmatprep.subr.mxu0 0.0
    %2146 = vmatpush1.msra.mxu0 0.0
    %2147 = vmatprep.subr.mxu0 0.0
    %2148 = vmatpush1.msra.mxu0 0.0
    %2149 = vmatprep.subr.mxu0 0.0
    %2150 = vmatpush1.msra.mxu0 0.0
    %2151 = vmatprep.subr.mxu0 0.0
    %2152 = vmatpush1.msra.mxu0 0.0
    %2153 = vmatprep.subr.mxu0 0.0
    %2154 = vmatpush1.msra.mxu0 0.0
    %2155 = vmatprep.subr.mxu0 0.0
    %2156 = vmatpush1.msra.mxu0 0.0
    %2157 = vmatprep.subr.mxu0 0.0
    %2158 = vmatpush1.msra.mxu0 0.0
    %2159 = vmatprep.subr.mxu0 0.0
    %2160 = vmatpush1.msra.mxu0 0.0
    %2161 = vmatprep.subr.mxu0 0.0
    %2162 = vmatpush1.msra.mxu0 0.0
    %2163 = vmatprep.subr.mxu0 0.0
    %2164 = vmatpush1.msra.mxu0 0.0
    %2165 = vmatprep.subr.mxu0 0.0
    %2166 = vmatpush1.msra.mxu0 0.0
    %2167 = vmatprep.subr.mxu0 0.0
    %2168 = vmatpush1.msra.mxu0 0.0
    %2169 = vmatprep.subr.mxu0 0.0
    %2170 = vmatpush1.msra.mxu0 0.0
    %2171 = vmatprep.subr.mxu0 0.0
    %2172 = vmatpush1.msra.mxu0 0.0
    %2173 = vmatprep.subr.mxu0 0.0
    %2174 = vmatpush1.msra.mxu0 0.0
    %2175 = vmatprep.subr.mxu0 0.0
    %2176 = vmatpush1.msra.mxu0 0.0
    %2177 = vmatprep.subr.mxu0 0.0
    %2178 = vmatpush1.msra.mxu0 0.0
    %2179 = vmatprep.subr.mxu0 0.0
    %2180 = vmatpush1.msra.mxu0 0.0
    %2181 = vmatprep.subr.mxu0 0.0
    %2182 = vmatpush1.msra.mxu0 0.0
    %2183 = vmatprep.subr.mxu0 0.0
    %2184 = vmatpush1.msra.mxu0 0.0
    %2185 = vmatprep.mubr.f32.mxu0 0.0
    %2186 = vmatmul.mubr.f32.gmra.mrb[0].mxu0 %v2119
    %v2187 = vpop.f32.mrb[0].mxu0
    %v2188 = vadd.f32 %v192, %v2187
    %v2189 = vpop.f32.mrb[0].mxu0
    %2190 = vdwg.mxu0
    %v2191 = vadd.f32 %v177, %v2113
    %v2192 = vmul.f32 %v2191, %v185
    %v2193 = vtanh.pop %v2192
    %v2194 = vmul.f32 %v2193, %v185
    %v2195 = vadd.f32 %v2194, %v186
    %v2196 = vmul.f32 %v2195, %v1943
    %2198 = vrot.lane.b32.xlu0 %v2195, 64
    %v2199 = vpop.permute.xlu0 %2198
    %v2201 = vmul.f32 %v2195, %v2199
    %2203 = vrot.lane.b32.xlu0 %v2201, 32
    %v2204 = vpop.permute.xlu0 %2203
    %v2206 = vadd.f32 %v2196, %v2204
    %v2207 = vtanh.pop %v2206
    %2209 = vrot.lane.b32.xlu0 %v2207, 64
    %v2210 = vpop.permute.xlu0 %2209
    %v2212 = vmul.f32 %v2195, %v2210
    %2214 = vrot.lane.b32.xlu0 %v2212, 32
    %v2215 = vpop.permute.xlu0 %2214
    %v2216 = vsel %vm198, %v2215, 0
    %2218 = vmatprep.subr.mxu0 0.0
    %2219 = vmatpush1.msra.mxu0 %v368
    %2220 = vmatprep.subr.mxu0 0.0
    %2221 = vmatpush1.msra.mxu0 %v369
    %2222 = vmatprep.subr.mxu0 0.0
    %2223 = vmatpush1.msra.mxu0 %v370
    %2224 = vmatprep.subr.mxu0 0.0
    %2225 = vmatpush1.msra.mxu0 %v371
    %2226 = vmatprep.subr.mxu0 0.0
    %2227 = vmatpush1.msra.mxu0 0.0
    %2228 = vmatprep.subr.mxu0 0.0
    %2229 = vmatpush1.msra.mxu0 0.0
    %2230 = vmatprep.subr.mxu0 0.0
    %2231 = vmatpush1.msra.mxu0 0.0
    %2232 = vmatprep.subr.mxu0 0.0
    %2233 = vmatpush1.msra.mxu0 0.0
    %2234 = vmatprep.subr.mxu0 0.0
    %2235 = vmatpush1.msra.mxu0 0.0
    %2236 = vmatprep.subr.mxu0 0.0
    %2237 = vmatpush1.msra.mxu0 0.0
    %2238 = vmatprep.subr.mxu0 0.0
    %2239 = vmatpush1.msra.mxu0 0.0
    %2240 = vmatprep.subr.mxu0 0.0
    %2241 = vmatpush1.msra.mxu0 0.0
    %2242 = vmatprep.subr.mxu0 0.0
    %2243 = vmatpush1.msra.mxu0 0.0
    %2244 = vmatprep.subr.mxu0 0.0
    %2245 = vmatpush1.msra.mxu0 0.0
    %2246 = vmatprep.subr.mxu0 0.0
    %2247 = vmatpush1.msra.mxu0 0.0
    %2248 = vmatprep.subr.mxu0 0.0
    %2249 = vmatpush1.msra.mxu0 0.0
    %2250 = vmatprep.subr.mxu0 0.0
    %2251 = vmatpush1.msra.mxu0 0.0
    %2252 = vmatprep.subr.mxu0 0.0
    %2253 = vmatpush1.msra.mxu0 0.0
    %2254 = vmatprep.subr.mxu0 0.0
    %2255 = vmatpush1.msra.mxu0 0.0
    %2256 = vmatprep.subr.mxu0 0.0
    %2257 = vmatpush1.msra.mxu0 0.0
    %2258 = vmatprep.subr.mxu0 0.0
    %2259 = vmatpush1.msra.mxu0 0.0
    %2260 = vmatprep.subr.mxu0 0.0
    %2261 = vmatpush1.msra.mxu0 0.0
    %2262 = vmatprep.subr.mxu0 0.0
    %2263 = vmatpush1.msra.mxu0 0.0
    %2264 = vmatprep.subr.mxu0 0.0
    %2265 = vmatpush1.msra.mxu0 0.0
    %2266 = vmatprep.subr.mxu0 0.0
    %2267 = vmatpush1.msra.mxu0 0.0
    %2268 = vmatprep.subr.mxu0 0.0
    %2269 = vmatpush1.msra.mxu0 0.0
    %2270 = vmatprep.subr.mxu0 0.0
    %2271 = vmatpush1.msra.mxu0 0.0
    %2272 = vmatprep.subr.mxu0 0.0
    %2273 = vmatpush1.msra.mxu0 0.0
    %2274 = vmatprep.subr.mxu0 0.0
    %2275 = vmatpush1.msra.mxu0 0.0
    %2276 = vmatprep.subr.mxu0 0.0
    %2277 = vmatpush1.msra.mxu0 0.0
    %2278 = vmatprep.subr.mxu0 0.0
    %2279 = vmatpush1.msra.mxu0 0.0
    %2280 = vmatprep.subr.mxu0 0.0
    %2281 = vmatpush1.msra.mxu0 0.0
    %2282 = vmatprep.mubr.f32.mxu0 0.0
    %2283 = vmatmul.mubr.f32.gmra.mrb[0].mxu0 %v2216
    %v2284 = vpop.f32.mrb[0].mxu0
    %v2285 = vadd.f32 %v2188, %v2284
    %v2286 = vpop.f32.mrb[0].mxu0
    %2287 = vdwg.mxu0
    %v2288 = vmul.f32 %v2285, %v185
    %v2289 = vtanh.pop %v2288
    %v2290 = vmul.f32 %v2289, %v185
    %v2291 = vadd.f32 %v2290, %v186
    %v2292 = vmul.f32 %v2291, %v2039
    %2294 = vrot.lane.b32.xlu0 %v2291, 64
    %v2295 = vpop.permute.xlu0 %2294
    %v2297 = vmul.f32 %v2291, %v2295
    %2299 = vrot.lane.b32.xlu0 %v2297, 32
    %v2300 = vpop.permute.xlu0 %2299
    %v2302 = vadd.f32 %v2292, %v2300
    %v2303 = vtanh.pop %v2302
    %2305 = vrot.lane.b32.xlu0 %v2303, 64
    %v2306 = vpop.permute.xlu0 %2305
    %v2308 = vmul.f32 %v2291, %v2306
    %v2309 = vld [vmem:[%s7] sm:$0xff]
    %v2310 = vld [vmem:[%s7 + $0x8] sm:$0xff]
    %v2311 = vld [vmem:[%s7 + $0x10] sm:$0xff]
    %v2312 = vld [vmem:[%s7 + $0x18] sm:$0xff]
    %v2313 = vld [vmem:[%s8] sm:$0x1]
    %v2315 = vlaneseq
    %v2316 = vshrl.u32 %v2315, 7
    %v2317 = vsub.s32 0, %v2316
    %v2318 = vrot.slane %v2313, %v2317
    %2321 = vrot.lane.b32.xlu0 %v2308, 32
    %v2322 = vpop.permute.xlu0 %2321
    %v2323 = vsel %vm198, %v2322, 0
    %2325 = vmatprep.subr.mxu0 0.0
    %2326 = vmatpush1.msra.mxu0 %v2309
    %2327 = vmatprep.subr.mxu0 0.0
    %2328 = vmatpush1.msra.mxu0 %v2310
    %2329 = vmatprep.subr.mxu0 0.0
    %2330 = vmatpush1.msra.mxu0 %v2311
    %2331 = vmatprep.subr.mxu0 0.0
    %2332 = vmatpush1.msra.mxu0 %v2312
    %2333 = vmatprep.subr.mxu0 0.0
    %2334 = vmatpush1.msra.mxu0 0.0
    %2335 = vmatprep.subr.mxu0 0.0
    %2336 = vmatpush1.msra.mxu0 0.0
    %2337 = vmatprep.subr.mxu0 0.0
    %2338 = vmatpush1.msra.mxu0 0.0
    %2339 = vmatprep.subr.mxu0 0.0
    %2340 = vmatpush1.msra.mxu0 0.0
    %2341 = vmatprep.subr.mxu0 0.0
    %2342 = vmatpush1.msra.mxu0 0.0
    %2343 = vmatprep.subr.mxu0 0.0
    %2344 = vmatpush1.msra.mxu0 0.0
    %2345 = vmatprep.subr.mxu0 0.0
    %2346 = vmatpush1.msra.mxu0 0.0
    %2347 = vmatprep.subr.mxu0 0.0
    %2348 = vmatpush1.msra.mxu0 0.0
    %2349 = vmatprep.subr.mxu0 0.0
    %2350 = vmatpush1.msra.mxu0 0.0
    %2351 = vmatprep.subr.mxu0 0.0
    %2352 = vmatpush1.msra.mxu0 0.0
    %2353 = vmatprep.subr.mxu0 0.0
    %2354 = vmatpush1.msra.mxu0 0.0
    %2355 = vmatprep.subr.mxu0 0.0
    %2356 = vmatpush1.msra.mxu0 0.0
    %2357 = vmatprep.subr.mxu0 0.0
    %2358 = vmatpush1.msra.mxu0 0.0
    %2359 = vmatprep.subr.mxu0 0.0
    %2360 = vmatpush1.msra.mxu0 0.0
    %2361 = vmatprep.subr.mxu0 0.0
    %2362 = vmatpush1.msra.mxu0 0.0
    %2363 = vmatprep.subr.mxu0 0.0
    %2364 = vmatpush1.msra.mxu0 0.0
    %2365 = vmatprep.subr.mxu0 0.0
    %2366 = vmatpush1.msra.mxu0 0.0
    %2367 = vmatprep.subr.mxu0 0.0
    %2368 = vmatpush1.msra.mxu0 0.0
    %2369 = vmatprep.subr.mxu0 0.0
    %2370 = vmatpush1.msra.mxu0 0.0
    %2371 = vmatprep.subr.mxu0 0.0
    %2372 = vmatpush1.msra.mxu0 0.0
    %2373 = vmatprep.subr.mxu0 0.0
    %2374 = vmatpush1.msra.mxu0 0.0
    %2375 = vmatprep.subr.mxu0 0.0
    %2376 = vmatpush1.msra.mxu0 0.0
    %2377 = vmatprep.subr.mxu0 0.0
    %2378 = vmatpush1.msra.mxu0 0.0
    %2379 = vmatprep.subr.mxu0 0.0
    %2380 = vmatpush1.msra.mxu0 0.0
    %2381 = vmatprep.subr.mxu0 0.0
    %2382 = vmatpush1.msra.mxu0 0.0
    %2383 = vmatprep.subr.mxu0 0.0
    %2384 = vmatpush1.msra.mxu0 0.0
    %2385 = vmatprep.subr.mxu0 0.0
    %2386 = vmatpush1.msra.mxu0 0.0
    %2387 = vmatprep.subr.mxu0 0.0
    %2388 = vmatpush1.msra.mxu0 0.0
    %2389 = vmatprep.mubr.f32.mxu0 0.0
    %2390 = vmatmul.mubr.f32.gmra.mrb[0].mxu0 %v2323
    %v2391 = vpop.f32.mrb[0].mxu0
    %v2392 = vadd.f32 %v2318, %v2391
    %v2393 = vpop.f32.mrb[0].mxu0
    %2394 = vdwg.mxu0
    %vm2395 = vcmask 64512
    %2396 = vst.msk [vmem:[#allocation2] sm:$0xff] %vm2395, %v2392
    // Predicated region
    $region38: #{tpu_custom_call.1} parent=1 // pred_check
      _
    $region39: #{tpu_custom_call.1} parent=1 // pred_check_branch
      %2398 = sbr.rel (0) target = $region41
    $region40: #{tpu_custom_call.1} parent=1 // pred_region
      %s2400 = ssub.s32 128, 128
      %2401 = vsyncadd [#allocation3], %s2400
      %s2403 = sshll.u32 [#allocation2], 4
      %s2404 = int_to_ptr.vmem [resolvable:$true] %s2403
      %2406 = dma.vmem_to_hbm [thread:$0]  %s2404, 128, %s9, [#allocation3]
    $region41: #{tpu_custom_call.1} parent=1 // pred_fallthru
      _
    // Predicated region
    $region42: #{tpu_custom_call.1} parent=1 // pred_check
      _
    $region43: #{tpu_custom_call.1} parent=1 // pred_check_branch
      %2408 = sbr.rel (0) target = $region45
    $region44: #{tpu_custom_call.1} parent=1 // pred_region
      %2409 = dma.done [#allocation3], 128
    $region45: #{tpu_custom_call.1} parent=1 // pred_fallthru
      _
    %2410 = vsyncpa [#allocation3], 1

</llo_original>
